<compile_context>
chip_gen: v7x
topology: tpu7x:2x2x1
jax: 0.10.0
libtpu: 0.0.40
codegen_flags: <defaults>
</compile_context>

<pallas_src>
import functools

import jax
import jax.numpy as jnp
from jax.experimental import pallas as pl
from jax.experimental.pallas import tpu as pltpu


# ---------------------------------------------------------------------------
# small static helpers
# ---------------------------------------------------------------------------
def _pick_tile(total, candidates):
    for c in candidates:
        if c <= total and total % c == 0:
            return c
    return total


def _largest_divisor_leq(n, cap):
    d = max(1, min(n, cap))
    while n % d:
        d -= 1
    return d


_VMEM_LIMIT = 32 * 1024 * 1024          # safe on v5e/v6e (128 MiB) and v7x (64 MiB)
_VMEM_BUDGET = 12 * 1024 * 1024         # per-kernel working-set target


# ---------------------------------------------------------------------------
# Pallas kernel bodies
# ---------------------------------------------------------------------------
def _matmul_bias_kernel(a_ref, b_ref, bias_ref, o_ref, acc_ref):
    """O = A @ B + bias.  Grid = (M tiles, K tiles), K innermost."""
    @pl.when(pl.program_id(1) == 0)
    def _():
        acc_ref[...] = jnp.broadcast_to(bias_ref[...], acc_ref.shape)

    acc_ref[...] += jnp.dot(a_ref[...], b_ref[...],
                            preferred_element_type=jnp.float32)

    @pl.when(pl.program_id(1) == pl.num_programs(1) - 1)
    def _():
        o_ref[...] = acc_ref[...].astype(o_ref.dtype)


def _conv3x3_kernel(*refs, th, wo, has_skip):
    """Im2col-free 3x3 / stride-1 / pad-1 conv, halo-slab DMA.

    Grid = (batch, output-row tile).  One (th+2, W+2, Cin) halo slab of the
    padded input is DMA'd per tile (double-buffered across tiles within a
    batch element); the 9 taps are accumulated in-kernel with the full
    (9, Cin, Cout) weight resident in VMEM.  Epilogue adds an optional fused
    residual skip.
    """
    if has_skip:
        w_ref, bias_ref, skip_ref, xp_ref, o_ref, xbuf, sem = refs
    else:
        w_ref, bias_ref, xp_ref, o_ref, xbuf, sem = refs
        skip_ref = None

    n = pl.program_id(0)
    h = pl.program_id(1)
    nh = pl.num_programs(1)
    slot = h % 2
    cin = xbuf.shape[-1]
    cout = o_ref.shape[-1]

    def slab_copy(hh, s):
        return pltpu.make_async_copy(
            xp_ref.at[n, pl.ds(hh * th, th + 2), :, :],
            xbuf.at[s],
            sem.at[s])

    # prime the pipeline at the start of each batch element (megacore-safe:
    # the prefetch chain never crosses the parallel batch axis)
    @pl.when(h == 0)
    def _():
        slab_copy(0, 0).start()

    # prefetch the next row-tile's halo slab into the other buffer slot
    @pl.when(h + 1 < nh)
    def _():
        slab_copy(h + 1, 1 - slot).start()

    slab_copy(h, slot).wait()

    # accumulator starts as the broadcast bias (saves the epilogue add)
    acc = jnp.broadcast_to(bias_ref[...], (th * wo, cout))
    for dy in range(3):
        for dx in range(3):
            xs = xbuf[slot, pl.ds(dy, th), pl.ds(dx, wo), :]      # (th, wo, Cin)
            acc = acc + jnp.dot(xs.reshape(th * wo, cin),
                                w_ref[dy * 3 + dx],
                                preferred_element_type=jnp.float32)
    if has_skip:
        acc = acc + skip_ref[0].astype(jnp.float32)
    o_ref[0] = acc.astype(o_ref.dtype)


def _gn_stats_kernel(x_ref, s_ref, ss_ref):
    """Per-channel sum / sum-of-squares, accumulated over HW tiles (f32)."""
    @pl.when(pl.program_id(1) == 0)
    def _():
        s_ref[...] = jnp.zeros_like(s_ref)
        ss_ref[...] = jnp.zeros_like(ss_ref)

    xf = x_ref[0].astype(jnp.float32)                    # (hw_t, C)
    s_ref[0] += jnp.sum(xf, axis=0, keepdims=True)       # (1, C)
    ss_ref[0] += jnp.sum(xf * xf, axis=0, keepdims=True)


def _gn_apply_kernel(x_ref, scale_ref, shift_ref, o_ref, *, swish):
    """y = x * scale + shift (per-batch per-channel), optional fused Swish."""
    xf = x_ref[0].astype(jnp.float32)                    # (hw_t, C)
    y = xf * scale_ref[0] + shift_ref[0]
    if swish:
        y = y * jax.nn.sigmoid(y)
    o_ref[0] = y.astype(o_ref.dtype)


def _attn_kernel(q_ref, k_ref, v_ref, skip_ref, o_ref, *, scale):
    """o = softmax(q.k^T * scale) @ v + skip for one (batch, q-tile)."""
    q = q_ref[0]                                         # (tq, C) bf16
    k = k_ref[0]                                         # (HW, C)
    v = v_ref[0]
    s = jax.lax.dot_general(q, k, (((1,), (1,)), ((), ())),
                            preferred_element_type=jnp.float32) * scale
    s = s - jnp.max(s, axis=-1, keepdims=True)
    p = jnp.exp(s)
    denom = jnp.sum(p, axis=-1, keepdims=True)
    o = jnp.dot(p.astype(v.dtype), v, preferred_element_type=jnp.float32)
    # normalize after p@v: (tq, C) multiplies instead of (tq, HW)
    o = o * pl.reciprocal(denom, approx=True)
    o = o + skip_ref[0].astype(jnp.float32)
    o_ref[0] = o.astype(o_ref.dtype)


# ---------------------------------------------------------------------------
# Pallas call wrappers
# ---------------------------------------------------------------------------
def matmul_bias(a, b, bias):
    """(M,K) @ (K,N) + bias(N,), bf16 operands, f32 accumulate."""
    M, K = a.shape
    K2, N = b.shape
    assert K == K2

    # K tile: full K when small, otherwise the largest multiple-of-128 divisor
    # (keeps the (8,128) block constraint satisfied).
    if K <= 1024:
        tk = K
    else:
        tk = K
        for d in range(128, 1025, 128):
            if K % d == 0:
                tk = d

    def vmem_bytes(tm_):
        return (2 * tm_ * tk * 2 + 2 * tk * N * 2 + 2 * tm_ * N * 2
                + tm_ * N * 4)

    # M tile: as large as the VMEM budget allows; keep >=2 blocks when M is
    # large enough so a megacore part (v7x) has work on both cores.
    cap_m = min(2048, M // 2) if M >= 1024 else M
    tm = _largest_divisor_leq(M, cap_m)
    while tm > 8 and vmem_bytes(tm) > _VMEM_BUDGET:
        tm = _largest_divisor_leq(M, max(8, tm // 2))
    if tm % 8 != 0 and tm != M:
        tm = M

    return pl.pallas_call(
        _matmul_bias_kernel,
        out_shape=jax.ShapeDtypeStruct((M, N), a.dtype),
        grid=(M // tm, K // tk),
        in_specs=[pl.BlockSpec((tm, tk), lambda m, k: (m, k)),
                  pl.BlockSpec((tk, N), lambda m, k: (k, 0)),
                  pl.BlockSpec((1, N), lambda m, k: (0, 0))],
        out_specs=pl.BlockSpec((tm, N), lambda m, k: (m, 0)),
        scratch_shapes=[pltpu.VMEM((tm, N), jnp.float32)],
        compiler_params=pltpu.CompilerParams(
            dimension_semantics=("parallel", "arbitrary"),
            vmem_limit_bytes=_VMEM_LIMIT),
    )(a, b, bias.reshape(1, N).astype(jnp.float32))


def conv3x3_s1(x, w9, bias, skip=None):
    """3x3, stride 1, pad 1 conv on NHWC bf16 input (halo-slab, im2col-free)."""
    Nb, H, W, Cin = x.shape
    _, _, Cout = w9.shape
    Ho, Wo, Wp = H, W, W + 2
    Mimg = Ho * Wo

    # single padded copy; dy/dx tap shifts are resolved by in-VMEM slicing
    xp = jnp.pad(x, ((0, 0), (1, 1), (1, 1), (0, 0)))          # (N, H+2, W+2, C)

    def vmem_bytes(th_):
        tm_ = th_ * Wo
        b = 2 * (th_ + 2) * Wp * Cin * 2            # halo slab double buffer
        b += 2 * 9 * Cin * Cout * 2                 # resident weights (x2 cons.)
        b += 2 * tm_ * Cout * 2 + tm_ * Cout * 4    # out blocks + f32 accumulator
        if skip is not None:
            b += 2 * tm_ * Cout * 2
        return b

    # target ~2048 flattened output rows per tile, bounded by the VMEM budget
    th = _largest_divisor_leq(Ho, max(1, 2048 // Wo))
    while th > 1 and vmem_bytes(th) > _VMEM_BUDGET:
        th = _largest_divisor_leq(Ho, th - 1)
    tm = th * Wo
    if tm % 8 != 0 and tm != Mimg:                  # (8,128) block constraint
        th, tm = Ho, Mimg

    kern = functools.partial(_conv3x3_kernel, th=th, wo=Wo,
                             has_skip=skip is not None)
    in_specs = [
        pl.BlockSpec((9, Cin, Cout), lambda n, h: (0, 0, 0)),   # resident weights
        pl.BlockSpec((1, Cout), lambda n, h: (0, 0)),
    ]
    ops = [w9, bias.reshape(1, Cout).astype(jnp.float32)]
    if skip is not None:
        in_specs.append(pl.BlockSpec((1, tm, Cout), lambda n, h: (n, h, 0)))
        ops.append(skip.reshape(Nb, Mimg, Cout))
    in_specs.append(pl.BlockSpec(memory_space=pl.ANY))          # raw HBM input
    ops.append(xp)

    out = pl.pallas_call(
        kern,
        out_shape=jax.ShapeDtypeStruct((Nb, Mimg, Cout), x.dtype),
        grid=(Nb, Ho // th),
        in_specs=in_specs,
        out_specs=pl.BlockSpec((1, tm, Cout), lambda n, h: (n, h, 0)),
        scratch_shapes=[
            pltpu.VMEM((2, th + 2, Wp, Cin), x.dtype),   # halo slab double buffer
            pltpu.SemaphoreType.DMA((2,)),
        ],
        compiler_params=pltpu.CompilerParams(
            dimension_semantics=("parallel", "arbitrary"),
            vmem_limit_bytes=_VMEM_LIMIT),
    )(*ops)
    return out.reshape(Nb, Ho, Wo, Cout)


def conv2d_im2col(x, w9, bias, stride, padding):
    """Fallback conv for conv_in (Cin=3) and the stride-2 DownSampleBlocks."""
    # TODO(synk): replace the stride-2 path with a halo-slab tap-accumulation
    # kernel (like conv3x3_s1) to avoid materializing the 9x im2col buffer.
    Nb, H, W, Cin = x.shape
    _, _, Cout = w9.shape
    kh = kw = 3
    xp = jnp.pad(x, ((0, 0), padding[0], padding[1], (0, 0)))
    Hp, Wp = xp.shape[1], xp.shape[2]
    Ho = (Hp - kh) // stride + 1
    Wo = (Wp - kw) // stride + 1
    patches = []
    for dy in range(kh):
        for dx in range(kw):
            patches.append(
                xp[:, dy:dy + stride * (Ho - 1) + 1:stride,
                      dx:dx + stride * (Wo - 1) + 1:stride, :])
    a = jnp.concatenate(patches, axis=-1).reshape(Nb * Ho * Wo, kh * kw * Cin)
    out = matmul_bias(a, w9.reshape(kh * kw * Cin, Cout), bias)
    return out.reshape(Nb, Ho, Wo, Cout)


def conv1x1(x, p):
    Nb, H, W, Cin = x.shape
    out = matmul_bias(x.reshape(Nb * H * W, Cin), p["w"], p["b"])
    return out.reshape(Nb, H, W, -1)


def group_norm(x, gamma, beta, swish, num_groups=32, eps=1e-6):
    """GroupNorm(32, C, eps=1e-6, affine) [+ Swish], channel-last, two-pass."""
    # TODO(synk): fuse the stats pass into the producing conv/matmul epilogues
    # to drop one full activation read per GroupNorm.
    Nb, H, W, C = x.shape
    G = num_groups
    Cg = C // G
    HW = H * W
    xf = x.reshape(Nb, HW, C)
    hw_t = _pick_tile(HW, (2048, 1024, 512, 256))

    # pass 1: per-channel sum / sumsq accumulated over HW tiles
    sums, sumsqs = pl.pallas_call(
        _gn_stats_kernel,
        out_shape=(jax.ShapeDtypeStruct((Nb, 1, C), jnp.float32),
                   jax.ShapeDtypeStruct((Nb, 1, C), jnp.float32)),
        grid=(Nb, HW // hw_t),
        in_specs=[pl.BlockSpec((1, hw_t, C), lambda n, h: (n, h, 0))],
        out_specs=(pl.BlockSpec((1, 1, C), lambda n, h: (n, 0, 0)),
                   pl.BlockSpec((1, 1, C), lambda n, h: (n, 0, 0))),
        compiler_params=pltpu.CompilerParams(
            dimension_semantics=("parallel", "arbitrary")),
    )(xf)

    # tiny per-group reduction / broadcast in XLA glue (biased variance)
    cnt = float(HW * Cg)
    s = sums[:, 0, :].reshape(Nb, G, Cg).sum(-1)
    ss = sumsqs[:, 0, :].reshape(Nb, G, Cg).sum(-1)
    mean = s / cnt
    var = jnp.maximum(ss / cnt - mean * mean, 0.0)
    rstd = jax.lax.rsqrt(var + eps)
    mean_c = jnp.repeat(mean, Cg, axis=-1)                     # (Nb, C)
    rstd_c = jnp.repeat(rstd, Cg, axis=-1)
    scale = (rstd_c * gamma[None, :]).reshape(Nb, 1, C).astype(jnp.float32)
    shift = (beta[None, :] - mean_c * rstd_c * gamma[None, :]
             ).reshape(Nb, 1, C).astype(jnp.float32)

    # pass 2: normalize + affine (+ swish), fully lane-dense blocks
    out = pl.pallas_call(
        functools.partial(_gn_apply_kernel, swish=swish),
        out_shape=jax.ShapeDtypeStruct((Nb, HW, C), x.dtype),
        grid=(Nb, HW // hw_t),
        in_specs=[pl.BlockSpec((1, hw_t, C), lambda n, h: (n, h, 0)),
                  pl.BlockSpec((1, 1, C), lambda n, h: (n, 0, 0)),
                  pl.BlockSpec((1, 1, C), lambda n, h: (n, 0, 0))],
        out_specs=pl.BlockSpec((1, hw_t, C), lambda n, h: (n, h, 0)),
        compiler_params=pltpu.CompilerParams(
            dimension_semantics=("parallel", "parallel")),
    )(xf, scale, shift)
    return out.reshape(Nb, H, W, C)


def attention(qkv, skip, scale):
    """softmax(q.k^T * scale) @ v + skip; q/k/v are channel blocks of qkv."""
    Nb, HW, C3 = qkv.shape
    C = C3 // 3
    tq = _largest_divisor_leq(HW, 512)
    if tq % 8 != 0 and tq != HW:
        tq = HW

    return pl.pallas_call(
        functools.partial(_attn_kernel, scale=scale),
        out_shape=jax.ShapeDtypeStruct((Nb, HW, C), qkv.dtype),
        grid=(Nb, HW // tq),
        in_specs=[pl.BlockSpec((1, tq, C), lambda n, i: (n, i, 0)),   # q tile
                  pl.BlockSpec((1, HW, C), lambda n, i: (n, 0, 1)),   # k (resident)
                  pl.BlockSpec((1, HW, C), lambda n, i: (n, 0, 2)),   # v (resident)
                  pl.BlockSpec((1, tq, C), lambda n, i: (n, i, 0))],  # residual
        out_specs=pl.BlockSpec((1, tq, C), lambda n, i: (n, i, 0)),
        compiler_params=pltpu.CompilerParams(
            dimension_semantics=("parallel", "parallel"),
            vmem_limit_bytes=_VMEM_LIMIT),
    )(qkv, qkv, qkv, skip)


# ---------------------------------------------------------------------------
# Module forwards (orchestration in plain JAX)
# ---------------------------------------------------------------------------
def residual_block(x, p):
    h = group_norm(x, p["gn1"]["g"], p["gn1"]["b"], swish=True)
    h = conv3x3_s1(h, p["conv1"]["w9"], p["conv1"]["b"])
    h = group_norm(h, p["gn2"]["g"], p["gn2"]["b"], swish=True)
    skip = conv1x1(x, p["up"]) if p["in"] != p["out"] else x
    # residual add fused into the second conv's epilogue
    return conv3x3_s1(h, p["conv2"]["w9"], p["conv2"]["b"], skip=skip)


def nonlocal_block(x, p):
    # NOTE: the reference NonLocalBlock.forward() returns x + A and never
    # applies proj_out, so no projection matmul is performed here.
    Nb, H, W, C = x.shape
    HW = H * W
    h = group_norm(x, p["gn"]["g"], p["gn"]["b"], swish=False)
    hf = h.reshape(Nb * HW, C)
    # fused q/k/v projection: one (C, 3C) matmul, hf read from HBM once
    wqkv = jnp.concatenate([p["q"]["w"], p["k"]["w"], p["v"]["w"]], axis=1)
    bqkv = jnp.concatenate([p["q"]["b"], p["k"]["b"], p["v"]["b"]], axis=0)
    qkv = matmul_bias(hf, wqkv, bqkv).reshape(Nb, HW, 3 * C)
    out = attention(qkv, x.reshape(Nb, HW, C), scale=float(C) ** (-0.5))
    return out.reshape(Nb, H, W, C)


def encoder_forward(x_nchw, layers):
    # cast to bf16 before the NCHW->NHWC transpose (halves transpose traffic)
    x = jnp.transpose(x_nchw.astype(jnp.bfloat16), (0, 2, 3, 1))
    for kind, p in layers:
        if kind == "conv_in":
            x = conv2d_im2col(x, p["w9"], p["b"], stride=1,
                              padding=((1, 1), (1, 1)))
        elif kind == "conv_out":
            x = conv3x3_s1(x, p["w9"], p["b"])
        elif kind == "down":
            # F.pad(x, (0,1,0,1)) then Conv(3, stride 2, pad 0)
            x = conv2d_im2col(x, p["w9"], p["b"], stride=2,
                              padding=((0, 1), (0, 1)))
        elif kind == "res":
            x = residual_block(x, p)
        elif kind == "attn":
            x = nonlocal_block(x, p)
        elif kind == "gn_swish":
            x = group_norm(x, p["g"], p["b"], swish=True)
    # transpose in bf16, cast to f32 last
    return jnp.transpose(x, (0, 3, 1, 2)).astype(jnp.float32)


# ---------------------------------------------------------------------------
# Deterministic synthetic parameter construction (mirrors Encoder.__init__)
# ---------------------------------------------------------------------------
class _KeyGen:
    def __init__(self, key):
        self.key = key

    def __call__(self):
        self.key, sub = jax.random.split(self.key)
        return sub


def build_encoder_params(key, image_channels, latent_dim):
    kg = _KeyGen(key)

    def conv3_p(cin, cout):
        w = jax.random.normal(kg(), (9, cin, cout), jnp.float32) * 0.02
        return {"w9": w.astype(jnp.bfloat16), "b": jnp.zeros((cout,), jnp.float32)}

    def conv1_p(cin, cout):
        w = jax.random.normal(kg(), (cin, cout), jnp.float32) * 0.02
        return {"w": w.astype(jnp.bfloat16), "b": jnp.zeros((cout,), jnp.float32)}

    def gn_p(c):
        return {"g": jnp.ones((c,), jnp.float32), "b": jnp.zeros((c,), jnp.float32)}

    def res_p(cin, cout):
        p = {"in": cin, "out": cout,
             "gn1": gn_p(cin), "conv1": conv3_p(cin, cout),
             "gn2": gn_p(cout), "conv2": conv3_p(cout, cout)}
        if cin != cout:
            p["up"] = conv1_p(cin, cout)
        return p

    def attn_p(c):
        # proj_out exists in the PyTorch module but is never used in forward()
        return {"c": c, "gn": gn_p(c),
                "q": conv1_p(c, c), "k": conv1_p(c, c), "v": conv1_p(c, c)}

    channels = [128, 128, 128, 256, 256, 512]
    attn_resolutions = [16]
    num_res_blocks = 2
    resolution = 256

    layers = [("conv_in", conv3_p(image_channels, channels[0]))]
    for i in range(len(channels) - 1):
        cin = channels[i]
        cout = channels[i + 1]
        for _ in range(num_res_blocks):
            layers.append(("res", res_p(cin, cout)))
            cin = cout
            if resolution in attn_resolutions:
                layers.append(("attn", attn_p(cin)))
        if i != len(channels) - 2:
            layers.append(("down", conv3_p(cout, cout)))
            resolution //= 2
    layers.append(("res", res_p(channels[-1], channels[-1])))
    layers.append(("attn", attn_p(channels[-1])))
    layers.append(("res", res_p(channels[-1], channels[-1])))
    layers.append(("gn_swish", gn_p(channels[-1])))
    layers.append(("conv_out", conv3_p(channels[-1], latent_dim)))
    return layers


# ---------------------------------------------------------------------------
if __name__ == "__main__":
    key = jax.random.PRNGKey(0)
    pkey, xkey = jax.random.split(key)

    image_channels = 3
    latent_dim = 16
    # Small spatial size (32x32); architecture/channels are fixed by the module.
    x = jax.random.normal(xkey, (2, image_channels, 32, 32), jnp.float32)  # NCHW

    params = build_encoder_params(pkey, image_channels, latent_dim)
    y = encoder_forward(x, params)
    y = jax.block_until_ready(y)

    # 32 -> (4 downsamples) -> 2 spatial, latent_dim channels, NCHW out.
    assert y.shape == (2, latent_dim, 2, 2), y.shape
    assert bool(jnp.all(jnp.isfinite(y)))
    print("KERNEL_OK")
</pallas_src>

<mosaic_0001>
module attributes {stable_mosaic.version = 11 : i64} {
  func.func @_matmul_bias_kernel(%arg0: i32, %arg1: i32, %arg2: memref<1024x27xbf16, #tpu.memory_space<vmem>>, %arg3: memref<27x128xbf16, #tpu.memory_space<vmem>>, %arg4: memref<1x128xf32, #tpu.memory_space<vmem>>, %arg5: memref<1024x128xbf16, #tpu.memory_space<vmem>>, %arg6: memref<1024x128xf32, #tpu.memory_space<vmem>>) attributes {dimension_semantics = [#tpu.dimension_semantics<parallel>, #tpu.dimension_semantics<arbitrary>], iteration_bounds = array<i64: 2, 1>, scalar_prefetch = 0 : i64, scratch_operands = 1 : i64, tpu.core_type = #tpu.core_type<tc>, window_params = [{transform_indices = @transform_0, window_bounds = array<i64: 1024, 27>}, {transform_indices = @transform_1, window_bounds = array<i64: 27, 128>}, {pipeline_mode = #tpu.pipeline_mode<synchronous>, transform_indices = @transform_2, window_bounds = array<i64: 1, 128>}, {transform_indices = @transform_3, window_bounds = array<i64: 1024, 128>}]} {
    %c0_i32 = arith.constant 0 : i32
    %0 = arith.cmpi eq, %arg1, %c0_i32 : i32
    %1 = arith.extui %0 : i1 to i32
    %c0_i32_0 = arith.constant 0 : i32
    %2 = arith.cmpi ne, %1, %c0_i32_0 : i32
    scf.if %2 {
      %c0_10 = arith.constant 0 : index
      %c0_11 = arith.constant 0 : index
      %12 = vector.load %arg4[%c0_10, %c0_11] : memref<1x128xf32, #tpu.memory_space<vmem>>, vector<1x128xf32>
      %13 = vector.shape_cast %12 : vector<1x128xf32> to vector<1x128xf32>
      %14 = vector.broadcast %13 : vector<1x128xf32> to vector<1024x128xf32>
      %c0_12 = arith.constant 0 : index
      %c0_13 = arith.constant 0 : index
      %15 = vector.load %arg6[%c0_12, %c0_13] : memref<1024x128xf32, #tpu.memory_space<vmem>>, vector<1024x128xf32>
      tpu.vector_store %arg6[%c0_12, %c0_13], %14 {strides = array<i32>} : memref<1024x128xf32, #tpu.memory_space<vmem>>, vector<1024x128xf32>,
    } else {
    }
    %c0 = arith.constant 0 : index
    %c0_1 = arith.constant 0 : index
    %3 = vector.load %arg6[%c0, %c0_1] : memref<1024x128xf32, #tpu.memory_space<vmem>>, vector<1024x128xf32>
    %c0_2 = arith.constant 0 : index
    %c0_3 = arith.constant 0 : index
    %4 = vector.load %arg2[%c0_2, %c0_3] : memref<1024x27xbf16, #tpu.memory_space<vmem>>, vector<1024x27xbf16>
    %c0_4 = arith.constant 0 : index
    %c0_5 = arith.constant 0 : index
    %5 = vector.load %arg3[%c0_4, %c0_5] : memref<27x128xbf16, #tpu.memory_space<vmem>>, vector<27x128xbf16>
    %cst = arith.constant dense<0.000000e+00> : vector<1024x128xf32>
    %6 = tpu.matmul %4, %5, %cst {dimension_numbers = #tpu.dot_dimension_numbers<[1], [0], [0], [1], [0, 0, 1, 1], [], []>} : vector<1024x27xbf16>, vector<27x128xbf16>, vector<1024x128xf32> -> vector<1024x128xf32>
    %7 = arith.addf %3, %6 : vector<1024x128xf32>
    %c0_6 = arith.constant 0 : index
    %c0_7 = arith.constant 0 : index
    %8 = vector.load %arg6[%c0_6, %c0_7] : memref<1024x128xf32, #tpu.memory_space<vmem>>, vector<1024x128xf32>
    tpu.vector_store %arg6[%c0_6, %c0_7], %7 {strides = array<i32>} : memref<1024x128xf32, #tpu.memory_space<vmem>>, vector<1024x128xf32>,
    %c0_i32_8 = arith.constant 0 : i32
    %9 = arith.cmpi eq, %arg1, %c0_i32_8 : i32
    %10 = arith.extui %9 : i1 to i32
    %c0_i32_9 = arith.constant 0 : i32
    %11 = arith.cmpi ne, %10, %c0_i32_9 : i32
    scf.if %11 {
      %c0_10 = arith.constant 0 : index
      %c0_11 = arith.constant 0 : index
      %12 = vector.load %arg6[%c0_10, %c0_11] : memref<1024x128xf32, #tpu.memory_space<vmem>>, vector<1024x128xf32>
      %13 = arith.truncf %12 : vector<1024x128xf32> to vector<1024x128xbf16>
      %c0_12 = arith.constant 0 : index
      %c0_13 = arith.constant 0 : index
      %14 = vector.load %arg5[%c0_12, %c0_13] : memref<1024x128xbf16, #tpu.memory_space<vmem>>, vector<1024x128xbf16>
      tpu.vector_store %arg5[%c0_12, %c0_13], %13 {strides = array<i32>} : memref<1024x128xbf16, #tpu.memory_space<vmem>>, vector<1024x128xbf16>,
    } else {
    }
    return
  }
  func.func @transform_0(%arg0: i32, %arg1: i32) -> (i32, i32) {
    %c0_i32 = arith.constant 0 : i32
    return %arg0, %arg1 : i32, i32
  }
  func.func @transform_1(%arg0: i32, %arg1: i32) -> (i32, i32) {
    %c0_i32 = arith.constant 0 : i32
    %c0_i32_0 = arith.constant 0 : i32
    return %arg1, %c0_i32 : i32, i32
  }
  func.func @transform_2(%arg0: i32, %arg1: i32) -> (i32, i32) {
    %c0_i32 = arith.constant 0 : i32
    %c0_i32_0 = arith.constant 0 : i32
    %c0_i32_1 = arith.constant 0 : i32
    return %c0_i32, %c0_i32_0 : i32, i32
  }
  func.func @transform_3(%arg0: i32, %arg1: i32) -> (i32, i32) {
    %c0_i32 = arith.constant 0 : i32
    %c0_i32_0 = arith.constant 0 : i32
    return %arg0, %c0_i32 : i32, i32
  }
}

</mosaic_0001>

<llo_original>
// kernel: tpu_custom_call.1
$region0: #{tpu_custom_call.1}
  #allocation0 [shape = 'u32[]', space=smem, size = 0x4, offset = 0x4, fixed_abs, tag = 'smem constant byte address 0x4 - core index']
  #allocation1 [shape = 'u32[144,128]{1,0:T(1,128)}', space=vmem, size = 0x12000, scoped, tag = 'internal scratch']
  #allocation2 [shape = 'f32[1024,128]{1,0:T(8,128)}', space=vmem, size = 0x80000, scoped, tag = 'scratch operand']
  %s0 = inlined_call_operand.vmem [shape: bf16[2048,27], index: 0, kind: input, shape index: {}]
  %s1 = inlined_call_operand.vmem [shape: bf16[27,128], index: 1, kind: input, shape index: {}]
  %s2 = inlined_call_operand.vmem [shape: f32[1,128], index: 2, kind: input, shape index: {}]
  %s3 = inlined_call_operand.hbm [shape: bf16[2048,128], index: 3, kind: output, shape index: {}]
  %s4 = sld [smem:[#allocation0]]
  $region53: #{tpu_custom_call.1} parent=0
    _
  %s6 = ssub.s32 1, %s4
  %s7 = scalar_select 0, %s6, %s4
  $region1: #{tpu_custom_call.1} parent=0
    #allocation3 [shape = 'u8[524288]{0}', space=vmem, size = 0x80000, scoped, tag = 'output window, operand 0']
    #allocation4 [shape = 's32[2]{0}', space=sflag, size = 0x8, scoped, tag = 'scoped memory for tpu_custom_call.1']
    %8 = vsyncpa [#allocation4], 0
    %s9 = scalar_lea.sflag [#allocation4], 1
    %10 = vsyncpa %s9, 0
    loop: start=0, step=1, limit=4
    $region2: #{tpu_custom_call.1} parent=1 // loop_pre_header
      _
    $region3: #{tpu_custom_call.1} parent=1 // loop_header
      %s12 = sphi 0, %s16
      %p13 = scmp.ge.s32.totalorder %s12, 4
      %s19 = sphi 0, %s31
      %s20 = sphi 0, %s27
      %s21 = sphi 0, %s19
      %s22 = sphi 0, %s20
      %s23 = sphi 0, %s21
      %s24 = sphi 0, %s22
      %s36 = sphi 0, %s38
      %s39 = sphi 0, %s36
      %s40 = sphi 0, %s39
      %s56 = sphi 0, %s40
      %s62 = sphi 0, %s64
      %s65 = sphi 0, %s62
      %s66 = sphi 0, %s65
      %s82 = sphi 0, %s66
      %s86 = sphi 0, %s86
      %s88 = sphi 0, %s86
      %s89 = sphi 0, %s88
      %s103 = sphi 0, %s89
      %s109 = sphi 0, %s111
      %s112 = sphi 0, %s109
      %s113 = sphi 0, %s112
      %s129 = sphi 0, %s113
    $region4: #{tpu_custom_call.1} parent=1 // loop_header_branch
      %15 = sbr.rel (%p13) target = $region8
    $region5: #{tpu_custom_call.1} parent=1 // loop_body
      %s17 = ssub.s32 %s12, 1
      %s18 = ssub.s32 %s12, 2
      %s25 = sadd.s32 1, %s20
      %p26 = scmp.ge.s32.totalorder %s25, 1
      %s27 = scalar_select %p26, 0, %s25
      %s28 = sadd.s32 1, %s19
      %s29 = scalar_select %p26, %s28, %s19
      %p30 = scmp.ge.s32.totalorder %s29, 2
      %s31 = scalar_select %p30, 0, %s29
      %s32 = ssub.s32 %s19, %s31
      %s33 = ssub.s32 %s20, %s27
      %s34 = sor.u32 %s32, %s33
      %p35 = scmp.eq.s32.totalorder %s34, 0
      %s37 = sadd.s32 %s36, 1
      %s38 = scalar_select %p35, %s36, %s37
      %p41 = pneg %p35
      %p42 = scmp.eq.s32.totalorder %s12, 1
      %p43 = por %p41, %p42
      %p44 = scmp.ne.s32.totalorder %s36, %s39
      %p45 = scmp.eq.s32.totalorder %s12, 0
      %p46 = por %p44, %p45
      %p47 = scmp.ne.s32.totalorder %s36, %s39
      %p48 = scmp.eq.s32.totalorder %s17, 1
      %p49 = por %p47, %p48
      %p50 = scmp.ne.s32.totalorder %s39, %s40
      %p51 = scmp.eq.s32.totalorder %s17, 0
      %p52 = por %p50, %p51
      %p53 = scmp.ne.s32.totalorder %s39, %s40
      %p54 = scmp.eq.s32.totalorder %s18, 1
      %p55 = por %p53, %p54
      %p57 = scmp.ne.s32.totalorder %s40, %s56
      %p58 = scmp.eq.s32.totalorder %s18, 0
      %p59 = por %p57, %p58
      %s60 = ssub.s32 %s20, %s27
      %p61 = scmp.eq.s32.totalorder %s60, 0
      %s63 = sadd.s32 %s62, 1
      %s64 = scalar_select %p61, %s62, %s63
      %p67 = pneg %p61
      %p68 = scmp.eq.s32.totalorder %s12, 1
      %p69 = por %p67, %p68
      %p70 = scmp.ne.s32.totalorder %s62, %s65
      %p71 = scmp.eq.s32.totalorder %s12, 0
      %p72 = por %p70, %p71
      %p73 = scmp.ne.s32.totalorder %s62, %s65
      %p74 = scmp.eq.s32.totalorder %s17, 1
      %p75 = por %p73, %p74
      %p76 = scmp.ne.s32.totalorder %s65, %s66
      %p77 = scmp.eq.s32.totalorder %s17, 0
      %p78 = por %p76, %p77
      %p79 = scmp.ne.s32.totalorder %s65, %s66
      %p80 = scmp.eq.s32.totalorder %s18, 1
      %p81 = por %p79, %p80
      %p83 = scmp.ne.s32.totalorder %s66, %s82
      %p84 = scmp.eq.s32.totalorder %s18, 0
      %p85 = por %p83, %p84
      %s87 = sadd.s32 %s86, 1
      %p90 = scmp.eq.s32.totalorder %s12, 1
      %p91 = scmp.ne.s32.totalorder %s86, %s88
      %p92 = scmp.eq.s32.totalorder %s12, 0
      %p93 = por %p91, %p92
      %p94 = scmp.ne.s32.totalorder %s86, %s88
      %p95 = scmp.eq.s32.totalorder %s17, 1
      %p96 = por %p94, %p95
      %p97 = scmp.ne.s32.totalorder %s88, %s89
      %p98 = scmp.eq.s32.totalorder %s17, 0
      %p99 = por %p97, %p98
      %p100 = scmp.ne.s32.totalorder %s88, %s89
      %p101 = scmp.eq.s32.totalorder %s18, 1
      %p102 = por %p100, %p101
      %p104 = scmp.ne.s32.totalorder %s89, %s103
      %p105 = scmp.eq.s32.totalorder %s18, 0
      %p106 = por %p104, %p105
      %s107 = ssub.s32 %s19, %s31
      %p108 = scmp.eq.s32.totalorder %s107, 0
      %s110 = sadd.s32 %s109, 1
      %s111 = scalar_select %p108, %s109, %s110
      %p114 = pneg %p108
      %p115 = scmp.eq.s32.totalorder %s12, 1
      %p116 = por %p114, %p115
      %p117 = scmp.ne.s32.totalorder %s109, %s112
      %p118 = scmp.eq.s32.totalorder %s12, 0
      %p119 = por %p117, %p118
      %p120 = scmp.ne.s32.totalorder %s109, %s112
      %p121 = scmp.eq.s32.totalorder %s17, 1
      %p122 = por %p120, %p121
      %p123 = scmp.ne.s32.totalorder %s112, %s113
      %p124 = scmp.eq.s32.totalorder %s17, 0
      %p125 = por %p123, %p124
      %p126 = scmp.ne.s32.totalorder %s112, %s113
      %p127 = scmp.eq.s32.totalorder %s18, 1
      %p128 = por %p126, %p127
      %p130 = scmp.ne.s32.totalorder %s113, %s129
      %p131 = scmp.eq.s32.totalorder %s18, 0
      %p132 = por %p130, %p131
      %p133 = scmp.le.s32.totalorder 1, %s12
      %p134 = scmp.lt.s32.totalorder %s12, 3
      %p135 = pnand %p133, %p134
      %p136 = pneg %p135
      // Predicated region
      $region9: #{tpu_custom_call.1} parent=5 // pred_check
        _
      $region10: #{tpu_custom_call.1} parent=5 // pred_check_branch
        %138 = sbr.rel (%p135) target = $region12
      $region11: #{tpu_custom_call.1} parent=5 // pred_region
        %s139 = ssub.s32 %s12, 1
        // Predicated region
        $region13: #{tpu_custom_call.1} parent=11 // pred_check
          %p140 = pneg %p78
        $region14: #{tpu_custom_call.1} parent=11 // pred_check_branch
          %142 = sbr.rel (%p140) target = $region16
        $region15: #{tpu_custom_call.1} parent=11 // pred_region
          %s143 = smul.u32 4, %s22
          %p144 = scmp.lt.s32.totalorder %s143, 3
          %s145 = scalar_select %p144, %s143, 3
          %s146 = smul.addr %s145, 4
          %s147 = scalar_lea.vmem %s1, %s146
          %s148 = smul.u32 4, %s22
        $region16: #{tpu_custom_call.1} parent=11 // pred_fallthru
          _
        // Predicated region
        $region17: #{tpu_custom_call.1} parent=11 // pred_check
          %p149 = pneg %p99
        $region18: #{tpu_custom_call.1} parent=11 // pred_check_branch
          %151 = sbr.rel (%p149) target = $region20
        $region19: #{tpu_custom_call.1} parent=11 // pred_region
          _
        $region20: #{tpu_custom_call.1} parent=11 // pred_fallthru
          _
      $region12: #{tpu_custom_call.1} parent=5 // pred_fallthru
        _
      %p152 = scmp.lt.s32.totalorder %s12, 2
      // Predicated region
      $region21: #{tpu_custom_call.1} parent=5 // pred_check
        %p153 = pneg %p152
      $region22: #{tpu_custom_call.1} parent=5 // pred_check_branch
        %155 = sbr.rel (%p153) target = $region24
      $region23: #{tpu_custom_call.1} parent=5 // pred_region
        // Predicated region
        $region25: #{tpu_custom_call.1} parent=23 // pred_check
          %p156 = pneg %p46
        $region26: #{tpu_custom_call.1} parent=23 // pred_check_branch
          %158 = sbr.rel (%p156) target = $region28
        $region27: #{tpu_custom_call.1} parent=23 // pred_region
          %s159 = smul.u32 128, %s19
          %p160 = scmp.lt.s32.totalorder %s159, 255
          %s161 = scalar_select %p160, %s159, 255
          %p162 = scmp.lt.s32.totalorder %s20, 0
          %s163 = scalar_select %p162, %s20, 0
          %s164 = sadd.s32 %s163, %s161
          %s165 = smul.addr %s164, 4
          %s166 = scalar_lea.vmem %s0, %s165
          %s167 = smul.u32 128, %s19
        $region28: #{tpu_custom_call.1} parent=23 // pred_fallthru
          _
      $region24: #{tpu_custom_call.1} parent=5 // pred_fallthru
        _
      %p168 = scmp.le.s32.totalorder 1, %s12
      %p169 = scmp.lt.s32.totalorder %s12, 3
      %p170 = pnand %p168, %p169
      %p171 = pneg %p170
      // Predicated region
      $region29: #{tpu_custom_call.1} parent=5 // pred_check
        _
      $region30: #{tpu_custom_call.1} parent=5 // pred_check_branch
        %173 = sbr.rel (%p170) target = $region32
      $region31: #{tpu_custom_call.1} parent=5 // pred_region
        %s174 = ssub.s32 %s12, 1
        %s175 = smul.u32 128, %s21
        %p176 = scmp.lt.s32.totalorder %s175, 255
        %s177 = scalar_select %p176, %s175, 255
        %p178 = scmp.lt.s32.totalorder %s22, 0
        %s179 = scalar_select %p178, %s22, 0
        %s180 = sadd.s32 %s179, %s177
        %s181 = smul.addr %s180, 4
        %s182 = scalar_lea.vmem %s0, %s181
        %p183 = pneg %p52
        %p184 = pneg %p49
        %s185 = smul.u32 4, %s22
        %p186 = scmp.lt.s32.totalorder %s185, 3
        %s187 = scalar_select %p186, %s185, 3
        %s188 = smul.addr %s187, 4
        %s189 = scalar_lea.vmem %s1, %s188
        %p190 = pneg %p78
        %p191 = pneg %p75
        %p192 = pneg %p99
        %p193 = pneg %p96
        %p194 = pneg %p125
        %p195 = pneg %p122
        %s196 = sand.u32 %s112, 1
        %s197 = scalar_lea.sflag [#allocation4], %s196
        %s198 = sand.u32 %s112, 1
        %s199 = smul.addr %s198, 512
        %s200 = scalar_lea.vmem [#allocation3], %s199
        %s201 = smul.u32 128, %s21
        %p202 = scmp.lt.s32.totalorder %s201, 255
        %s203 = scalar_select %p202, %s201, 255
        %p204 = scmp.lt.s32.totalorder %s22, 0
        %s205 = scalar_select %p204, %s22, 0
        %s206 = sadd.s32 %s205, %s203
        %s207 = smul.addr %s206, 4
        %s208 = scalar_lea.vmem %s0, %s207
        %s209 = smul.u32 128, %s21
        %s210 = smul.u32 4, %s22
        %p211 = scmp.lt.s32.totalorder %s210, 3
        %s212 = scalar_select %p211, %s210, 3
        %s213 = smul.addr %s212, 4
        %s214 = scalar_lea.vmem %s1, %s213
        %s215 = smul.u32 4, %s22
        %s216 = smul.u32 128, %s21
        %p218 = scmp.eq.s32.totalorder %s22, 0
        // Predicated region
        $region33: #{tpu_custom_call.1} parent=31 // pred_check
          %p219 = pneg %p218
        $region34: #{tpu_custom_call.1} parent=31 // pred_check_branch
          %221 = sbr.rel (%p219) target = $region36
        $region35: #{tpu_custom_call.1} parent=31 // pred_region
          %v222 = vld [vmem:[%s2] sm:$0x1]
          %v224 = vlaneseq
          %v225 = vshrl.u32 %v224, 7
          %v226 = vsub.s32 0, %v225
          %v227 = vrot.slane %v222, %v226
          %229 = vst [vmem:[#allocation2] sm:$0xff] %v227
          %230 = vst [vmem:[#allocation2 + $0x8] sm:$0xff] %v227
          %231 = vst [vmem:[#allocation2 + $0x10] sm:$0xff] %v227
          %232 = vst [vmem:[#allocation2 + $0x18] sm:$0xff] %v227
          %233 = vst [vmem:[#allocation2 + $0x20] sm:$0xff] %v227
          %234 = vst [vmem:[#allocation2 + $0x28] sm:$0xff] %v227
          %235 = vst [vmem:[#allocation2 + $0x30] sm:$0xff] %v227
          %236 = vst [vmem:[#allocation2 + $0x38] sm:$0xff] %v227
          %237 = vst [vmem:[#allocation2 + $0x40] sm:$0xff] %v227
          %238 = vst [vmem:[#allocation2 + $0x48] sm:$0xff] %v227
          %239 = vst [vmem:[#allocation2 + $0x50] sm:$0xff] %v227
          %240 = vst [vmem:[#allocation2 + $0x58] sm:$0xff] %v227
          %241 = vst [vmem:[#allocation2 + $0x60] sm:$0xff] %v227
          %242 = vst [vmem:[#allocation2 + $0x68] sm:$0xff] %v227
          %243 = vst [vmem:[#allocation2 + $0x70] sm:$0xff] %v227
          %244 = vst [vmem:[#allocation2 + $0x78] sm:$0xff] %v227
          %245 = vst [vmem:[#allocation2 + $0x80] sm:$0xff] %v227
          %246 = vst [vmem:[#allocation2 + $0x88] sm:$0xff] %v227
          %247 = vst [vmem:[#allocation2 + $0x90] sm:$0xff] %v227
          %248 = vst [vmem:[#allocation2 + $0x98] sm:$0xff] %v227
          %249 = vst [vmem:[#allocation2 + $0xa0] sm:$0xff] %v227
          %250 = vst [vmem:[#allocation2 + $0xa8] sm:$0xff] %v227
          %251 = vst [vmem:[#allocation2 + $0xb0] sm:$0xff] %v227
          %252 = vst [vmem:[#allocation2 + $0xb8] sm:$0xff] %v227
          %253 = vst [vmem:[#allocation2 + $0xc0] sm:$0xff] %v227
          %254 = vst [vmem:[#allocation2 + $0xc8] sm:$0xff] %v227
          %255 = vst [vmem:[#allocation2 + $0xd0] sm:$0xff] %v227
          %256 = vst [vmem:[#allocation2 + $0xd8] sm:$0xff] %v227
          %257 = vst [vmem:[#allocation2 + $0xe0] sm:$0xff] %v227
          %258 = vst [vmem:[#allocation2 + $0xe8] sm:$0xff] %v227
          %259 = vst [vmem:[#allocation2 + $0xf0] sm:$0xff] %v227
          %260 = vst [vmem:[#allocation2 + $0xf8] sm:$0xff] %v227
          %261 = vst [vmem:[#allocation2 + $0x100] sm:$0xff] %v227
          %262 = vst [vmem:[#allocation2 + $0x108] sm:$0xff] %v227
          %263 = vst [vmem:[#allocation2 + $0x110] sm:$0xff] %v227
          %264 = vst [vmem:[#allocation2 + $0x118] sm:$0xff] %v227
          %265 = vst [vmem:[#allocation2 + $0x120] sm:$0xff] %v227
          %266 = vst [vmem:[#allocation2 + $0x128] sm:$0xff] %v227
          %267 = vst [vmem:[#allocation2 + $0x130] sm:$0xff] %v227
          %268 = vst [vmem:[#allocation2 + $0x138] sm:$0xff] %v227
          %269 = vst [vmem:[#allocation2 + $0x140] sm:$0xff] %v227
          %270 = vst [vmem:[#allocation2 + $0x148] sm:$0xff] %v227
          %271 = vst [vmem:[#allocation2 + $0x150] sm:$0xff] %v227
          %272 = vst [vmem:[#allocation2 + $0x158] sm:$0xff] %v227
          %273 = vst [vmem:[#allocation2 + $0x160] sm:$0xff] %v227
          %274 = vst [vmem:[#allocation2 + $0x168] sm:$0xff] %v227
          %275 = vst [vmem:[#allocation2 + $0x170] sm:$0xff] %v227
          %276 = vst [vmem:[#allocation2 + $0x178] sm:$0xff] %v227
          %277 = vst [vmem:[#allocation2 + $0x180] sm:$0xff] %v227
          %278 = vst [vmem:[#allocation2 + $0x188] sm:$0xff] %v227
          %279 = vst [vmem:[#allocation2 + $0x190] sm:$0xff] %v227
          %280 = vst [vmem:[#allocation2 + $0x198] sm:$0xff] %v227
          %281 = vst [vmem:[#allocation2 + $0x1a0] sm:$0xff] %v227
          %282 = vst [vmem:[#allocation2 + $0x1a8] sm:$0xff] %v227
          %283 = vst [vmem:[#allocation2 + $0x1b0] sm:$0xff] %v227
          %284 = vst [vmem:[#allocation2 + $0x1b8] sm:$0xff] %v227
          %285 = vst [vmem:[#allocation2 + $0x1c0] sm:$0xff] %v227
          %286 = vst [vmem:[#allocation2 + $0x1c8] sm:$0xff] %v227
          %287 = vst [vmem:[#allocation2 + $0x1d0] sm:$0xff] %v227
          %288 = vst [vmem:[#allocation2 + $0x1d8] sm:$0xff] %v227
          %289 = vst [vmem:[#allocation2 + $0x1e0] sm:$0xff] %v227
          %290 = vst [vmem:[#allocation2 + $0x1e8] sm:$0xff] %v227
          %291 = vst [vmem:[#allocation2 + $0x1f0] sm:$0xff] %v227
          %292 = vst [vmem:[#allocation2 + $0x1f8] sm:$0xff] %v227
          %293 = vst [vmem:[#allocation2 + $0x200] sm:$0xff] %v227
          %294 = vst [vmem:[#allocation2 + $0x208] sm:$0xff] %v227
          %295 = vst [vmem:[#allocation2 + $0x210] sm:$0xff] %v227
          %296 = vst [vmem:[#allocation2 + $0x218] sm:$0xff] %v227
          %297 = vst [vmem:[#allocation2 + $0x220] sm:$0xff] %v227
          %298 = vst [vmem:[#allocation2 + $0x228] sm:$0xff] %v227
          %299 = vst [vmem:[#allocation2 + $0x230] sm:$0xff] %v227
          %300 = vst [vmem:[#allocation2 + $0x238] sm:$0xff] %v227
          %301 = vst [vmem:[#allocation2 + $0x240] sm:$0xff] %v227
          %302 = vst [vmem:[#allocation2 + $0x248] sm:$0xff] %v227
          %303 = vst [vmem:[#allocation2 + $0x250] sm:$0xff] %v227
          %304 = vst [vmem:[#allocation2 + $0x258] sm:$0xff] %v227
          %305 = vst [vmem:[#allocation2 + $0x260] sm:$0xff] %v227
          %306 = vst [vmem:[#allocation2 + $0x268] sm:$0xff] %v227
          %307 = vst [vmem:[#allocation2 + $0x270] sm:$0xff] %v227
          %308 = vst [vmem:[#allocation2 + $0x278] sm:$0xff] %v227
          %309 = vst [vmem:[#allocation2 + $0x280] sm:$0xff] %v227
          %310 = vst [vmem:[#allocation2 + $0x288] sm:$0xff] %v227
          %311 = vst [vmem:[#allocation2 + $0x290] sm:$0xff] %v227
          %312 = vst [vmem:[#allocation2 + $0x298] sm:$0xff] %v227
          %313 = vst [vmem:[#allocation2 + $0x2a0] sm:$0xff] %v227
          %314 = vst [vmem:[#allocation2 + $0x2a8] sm:$0xff] %v227
          %315 = vst [vmem:[#allocation2 + $0x2b0] sm:$0xff] %v227
          %316 = vst [vmem:[#allocation2 + $0x2b8] sm:$0xff] %v227
          %317 = vst [vmem:[#allocation2 + $0x2c0] sm:$0xff] %v227
          %318 = vst [vmem:[#allocation2 + $0x2c8] sm:$0xff] %v227
          %319 = vst [vmem:[#allocation2 + $0x2d0] sm:$0xff] %v227
          %320 = vst [vmem:[#allocation2 + $0x2d8] sm:$0xff] %v227
          %321 = vst [vmem:[#allocation2 + $0x2e0] sm:$0xff] %v227
          %322 = vst [vmem:[#allocation2 + $0x2e8] sm:$0xff] %v227
          %323 = vst [vmem:[#allocation2 + $0x2f0] sm:$0xff] %v227
          %324 = vst [vmem:[#allocation2 + $0x2f8] sm:$0xff] %v227
          %325 = vst [vmem:[#allocation2 + $0x300] sm:$0xff] %v227
          %326 = vst [vmem:[#allocation2 + $0x308] sm:$0xff] %v227
          %327 = vst [vmem:[#allocation2 + $0x310] sm:$0xff] %v227
          %328 = vst [vmem:[#allocation2 + $0x318] sm:$0xff] %v227
          %329 = vst [vmem:[#allocation2 + $0x320] sm:$0xff] %v227
          %330 = vst [vmem:[#allocation2 + $0x328] sm:$0xff] %v227
          %331 = vst [vmem:[#allocation2 + $0x330] sm:$0xff] %v227
          %332 = vst [vmem:[#allocation2 + $0x338] sm:$0xff] %v227
          %333 = vst [vmem:[#allocation2 + $0x340] sm:$0xff] %v227
          %334 = vst [vmem:[#allocation2 + $0x348] sm:$0xff] %v227
          %335 = vst [vmem:[#allocation2 + $0x350] sm:$0xff] %v227
          %336 = vst [vmem:[#allocation2 + $0x358] sm:$0xff] %v227
          %337 = vst [vmem:[#allocation2 + $0x360] sm:$0xff] %v227
          %338 = vst [vmem:[#allocation2 + $0x368] sm:$0xff] %v227
          %339 = vst [vmem:[#allocation2 + $0x370] sm:$0xff] %v227
          %340 = vst [vmem:[#allocation2 + $0x378] sm:$0xff] %v227
          %341 = vst [vmem:[#allocation2 + $0x380] sm:$0xff] %v227
          %342 = vst [vmem:[#allocation2 + $0x388] sm:$0xff] %v227
          %343 = vst [vmem:[#allocation2 + $0x390] sm:$0xff] %v227
          %344 = vst [vmem:[#allocation2 + $0x398] sm:$0xff] %v227
          %345 = vst [vmem:[#allocation2 + $0x3a0] sm:$0xff] %v227
          %346 = vst [vmem:[#allocation2 + $0x3a8] sm:$0xff] %v227
          %347 = vst [vmem:[#allocation2 + $0x3b0] sm:$0xff] %v227
          %348 = vst [vmem:[#allocation2 + $0x3b8] sm:$0xff] %v227
          %349 = vst [vmem:[#allocation2 + $0x3c0] sm:$0xff] %v227
          %350 = vst [vmem:[#allocation2 + $0x3c8] sm:$0xff] %v227
          %351 = vst [vmem:[#allocation2 + $0x3d0] sm:$0xff] %v227
          %352 = vst [vmem:[#allocation2 + $0x3d8] sm:$0xff] %v227
          %353 = vst [vmem:[#allocation2 + $0x3e0] sm:$0xff] %v227
          %354 = vst [vmem:[#allocation2 + $0x3e8] sm:$0xff] %v227
          %355 = vst [vmem:[#allocation2 + $0x3f0] sm:$0xff] %v227
          %356 = vst [vmem:[#allocation2 + $0x3f8] sm:$0xff] %v227
        $region36: #{tpu_custom_call.1} parent=31 // pred_fallthru
          _
        %v357 = vld [vmem:[#allocation2] sm:$0xff]
        %v358 = vld [vmem:[#allocation2 + $0x8] sm:$0xff]
        %v359 = vld [vmem:[#allocation2 + $0x10] sm:$0xff]
        %v360 = vld [vmem:[#allocation2 + $0x18] sm:$0xff]
        %v361 = vld [vmem:[#allocation2 + $0x20] sm:$0xff]
        %v362 = vld [vmem:[#allocation2 + $0x28] sm:$0xff]
        %v363 = vld [vmem:[#allocation2 + $0x30] sm:$0xff]
        %v364 = vld [vmem:[#allocation2 + $0x38] sm:$0xff]
        %v365 = vld [vmem:[#allocation2 + $0x40] sm:$0xff]
        %v366 = vld [vmem:[#allocation2 + $0x48] sm:$0xff]
        %v367 = vld [vmem:[#allocation2 + $0x50] sm:$0xff]
        %v368 = vld [vmem:[#allocation2 + $0x58] sm:$0xff]
        %v369 = vld [vmem:[#allocation2 + $0x60] sm:$0xff]
        %v370 = vld [vmem:[#allocation2 + $0x68] sm:$0xff]
        %v371 = vld [vmem:[#allocation2 + $0x70] sm:$0xff]
        %v372 = vld [vmem:[#allocation2 + $0x78] sm:$0xff]
        %v373 = vld [vmem:[#allocation2 + $0x80] sm:$0xff]
        %v374 = vld [vmem:[#allocation2 + $0x88] sm:$0xff]
        %v375 = vld [vmem:[#allocation2 + $0x90] sm:$0xff]
        %v376 = vld [vmem:[#allocation2 + $0x98] sm:$0xff]
        %v377 = vld [vmem:[#allocation2 + $0xa0] sm:$0xff]
        %v378 = vld [vmem:[#allocation2 + $0xa8] sm:$0xff]
        %v379 = vld [vmem:[#allocation2 + $0xb0] sm:$0xff]
        %v380 = vld [vmem:[#allocation2 + $0xb8] sm:$0xff]
        %v381 = vld [vmem:[#allocation2 + $0xc0] sm:$0xff]
        %v382 = vld [vmem:[#allocation2 + $0xc8] sm:$0xff]
        %v383 = vld [vmem:[#allocation2 + $0xd0] sm:$0xff]
        %v384 = vld [vmem:[#allocation2 + $0xd8] sm:$0xff]
        %v385 = vld [vmem:[#allocation2 + $0xe0] sm:$0xff]
        %v386 = vld [vmem:[#allocation2 + $0xe8] sm:$0xff]
        %v387 = vld [vmem:[#allocation2 + $0xf0] sm:$0xff]
        %v388 = vld [vmem:[#allocation2 + $0xf8] sm:$0xff]
        %v389 = vld [vmem:[#allocation2 + $0x100] sm:$0xff]
        %v390 = vld [vmem:[#allocation2 + $0x108] sm:$0xff]
        %v391 = vld [vmem:[#allocation2 + $0x110] sm:$0xff]
        %v392 = vld [vmem:[#allocation2 + $0x118] sm:$0xff]
        %v393 = vld [vmem:[#allocation2 + $0x120] sm:$0xff]
        %v394 = vld [vmem:[#allocation2 + $0x128] sm:$0xff]
        %v395 = vld [vmem:[#allocation2 + $0x130] sm:$0xff]
        %v396 = vld [vmem:[#allocation2 + $0x138] sm:$0xff]
        %v397 = vld [vmem:[#allocation2 + $0x140] sm:$0xff]
        %v398 = vld [vmem:[#allocation2 + $0x148] sm:$0xff]
        %v399 = vld [vmem:[#allocation2 + $0x150] sm:$0xff]
        %v400 = vld [vmem:[#allocation2 + $0x158] sm:$0xff]
        %v401 = vld [vmem:[#allocation2 + $0x160] sm:$0xff]
        %v402 = vld [vmem:[#allocation2 + $0x168] sm:$0xff]
        %v403 = vld [vmem:[#allocation2 + $0x170] sm:$0xff]
        %v404 = vld [vmem:[#allocation2 + $0x178] sm:$0xff]
        %v405 = vld [vmem:[#allocation2 + $0x180] sm:$0xff]
        %v406 = vld [vmem:[#allocation2 + $0x188] sm:$0xff]
        %v407 = vld [vmem:[#allocation2 + $0x190] sm:$0xff]
        %v408 = vld [vmem:[#allocation2 + $0x198] sm:$0xff]
        %v409 = vld [vmem:[#allocation2 + $0x1a0] sm:$0xff]
        %v410 = vld [vmem:[#allocation2 + $0x1a8] sm:$0xff]
        %v411 = vld [vmem:[#allocation2 + $0x1b0] sm:$0xff]
        %v412 = vld [vmem:[#allocation2 + $0x1b8] sm:$0xff]
        %v413 = vld [vmem:[#allocation2 + $0x1c0] sm:$0xff]
        %v414 = vld [vmem:[#allocation2 + $0x1c8] sm:$0xff]
        %v415 = vld [vmem:[#allocation2 + $0x1d0] sm:$0xff]
        %v416 = vld [vmem:[#allocation2 + $0x1d8] sm:$0xff]
        %v417 = vld [vmem:[#allocation2 + $0x1e0] sm:$0xff]
        %v418 = vld [vmem:[#allocation2 + $0x1e8] sm:$0xff]
        %v419 = vld [vmem:[#allocation2 + $0x1f0] sm:$0xff]
        %v420 = vld [vmem:[#allocation2 + $0x1f8] sm:$0xff]
        %v421 = vld [vmem:[#allocation2 + $0x200] sm:$0xff]
        %v422 = vld [vmem:[#allocation2 + $0x208] sm:$0xff]
        %v423 = vld [vmem:[#allocation2 + $0x210] sm:$0xff]
        %v424 = vld [vmem:[#allocation2 + $0x218] sm:$0xff]
        %v425 = vld [vmem:[#allocation2 + $0x220] sm:$0xff]
        %v426 = vld [vmem:[#allocation2 + $0x228] sm:$0xff]
        %v427 = vld [vmem:[#allocation2 + $0x230] sm:$0xff]
        %v428 = vld [vmem:[#allocation2 + $0x238] sm:$0xff]
        %v429 = vld [vmem:[#allocation2 + $0x240] sm:$0xff]
        %v430 = vld [vmem:[#allocation2 + $0x248] sm:$0xff]
        %v431 = vld [vmem:[#allocation2 + $0x250] sm:$0xff]
        %v432 = vld [vmem:[#allocation2 + $0x258] sm:$0xff]
        %v433 = vld [vmem:[#allocation2 + $0x260] sm:$0xff]
        %v434 = vld [vmem:[#allocation2 + $0x268] sm:$0xff]
        %v435 = vld [vmem:[#allocation2 + $0x270] sm:$0xff]
        %v436 = vld [vmem:[#allocation2 + $0x278] sm:$0xff]
        %v437 = vld [vmem:[#allocation2 + $0x280] sm:$0xff]
        %v438 = vld [vmem:[#allocation2 + $0x288] sm:$0xff]
        %v439 = vld [vmem:[#allocation2 + $0x290] sm:$0xff]
        %v440 = vld [vmem:[#allocation2 + $0x298] sm:$0xff]
        %v441 = vld [vmem:[#allocation2 + $0x2a0] sm:$0xff]
        %v442 = vld [vmem:[#allocation2 + $0x2a8] sm:$0xff]
        %v443 = vld [vmem:[#allocation2 + $0x2b0] sm:$0xff]
        %v444 = vld [vmem:[#allocation2 + $0x2b8] sm:$0xff]
        %v445 = vld [vmem:[#allocation2 + $0x2c0] sm:$0xff]
        %v446 = vld [vmem:[#allocation2 + $0x2c8] sm:$0xff]
        %v447 = vld [vmem:[#allocation2 + $0x2d0] sm:$0xff]
        %v448 = vld [vmem:[#allocation2 + $0x2d8] sm:$0xff]
        %v449 = vld [vmem:[#allocation2 + $0x2e0] sm:$0xff]
        %v450 = vld [vmem:[#allocation2 + $0x2e8] sm:$0xff]
        %v451 = vld [vmem:[#allocation2 + $0x2f0] sm:$0xff]
        %v452 = vld [vmem:[#allocation2 + $0x2f8] sm:$0xff]
        %v453 = vld [vmem:[#allocation2 + $0x300] sm:$0xff]
        %v454 = vld [vmem:[#allocation2 + $0x308] sm:$0xff]
        %v455 = vld [vmem:[#allocation2 + $0x310] sm:$0xff]
        %v456 = vld [vmem:[#allocation2 + $0x318] sm:$0xff]
        %v457 = vld [vmem:[#allocation2 + $0x320] sm:$0xff]
        %v458 = vld [vmem:[#allocation2 + $0x328] sm:$0xff]
        %v459 = vld [vmem:[#allocation2 + $0x330] sm:$0xff]
        %v460 = vld [vmem:[#allocation2 + $0x338] sm:$0xff]
        %v461 = vld [vmem:[#allocation2 + $0x340] sm:$0xff]
        %v462 = vld [vmem:[#allocation2 + $0x348] sm:$0xff]
        %v463 = vld [vmem:[#allocation2 + $0x350] sm:$0xff]
        %v464 = vld [vmem:[#allocation2 + $0x358] sm:$0xff]
        %v465 = vld [vmem:[#allocation2 + $0x360] sm:$0xff]
        %v466 = vld [vmem:[#allocation2 + $0x368] sm:$0xff]
        %v467 = vld [vmem:[#allocation2 + $0x370] sm:$0xff]
        %v468 = vld [vmem:[#allocation2 + $0x378] sm:$0xff]
        %v469 = vld [vmem:[#allocation2 + $0x380] sm:$0xff]
        %v470 = vld [vmem:[#allocation2 + $0x388] sm:$0xff]
        %v471 = vld [vmem:[#allocation2 + $0x390] sm:$0xff]
        %v472 = vld [vmem:[#allocation2 + $0x398] sm:$0xff]
        %v473 = vld [vmem:[#allocation2 + $0x3a0] sm:$0xff]
        %v474 = vld [vmem:[#allocation2 + $0x3a8] sm:$0xff]
        %v475 = vld [vmem:[#allocation2 + $0x3b0] sm:$0xff]
        %v476 = vld [vmem:[#allocation2 + $0x3b8] sm:$0xff]
        %v477 = vld [vmem:[#allocation2 + $0x3c0] sm:$0xff]
        %v478 = vld [vmem:[#allocation2 + $0x3c8] sm:$0xff]
        %v479 = vld [vmem:[#allocation2 + $0x3d0] sm:$0xff]
        %v480 = vld [vmem:[#allocation2 + $0x3d8] sm:$0xff]
        %v481 = vld [vmem:[#allocation2 + $0x3e0] sm:$0xff]
        %v482 = vld [vmem:[#allocation2 + $0x3e8] sm:$0xff]
        %v483 = vld [vmem:[#allocation2 + $0x3f0] sm:$0xff]
        %v484 = vld [vmem:[#allocation2 + $0x3f8] sm:$0xff]
        %v485 = vld [vmem:[%s208] sm:$0xf]
        %v486 = vld [vmem:[%s208 + $0x4] sm:$0xf]
        %v487 = vld [vmem:[%s208 + $0x8] sm:$0xf]
        %v488 = vld [vmem:[%s208 + $0xc] sm:$0xf]
        %v489 = vld [vmem:[%s208 + $0x10] sm:$0xf]
        %v490 = vld [vmem:[%s208 + $0x14] sm:$0xf]
        %v491 = vld [vmem:[%s208 + $0x18] sm:$0xf]
        %v492 = vld [vmem:[%s208 + $0x1c] sm:$0xf]
        %v493 = vld [vmem:[%s208 + $0x20] sm:$0xf]
        %v494 = vld [vmem:[%s208 + $0x24] sm:$0xf]
        %v495 = vld [vmem:[%s208 + $0x28] sm:$0xf]
        %v496 = vld [vmem:[%s208 + $0x2c] sm:$0xf]
        %v497 = vld [vmem:[%s208 + $0x30] sm:$0xf]
        %v498 = vld [vmem:[%s208 + $0x34] sm:$0xf]
        %v499 = vld [vmem:[%s208 + $0x38] sm:$0xf]
        %v500 = vld [vmem:[%s208 + $0x3c] sm:$0xf]
        %v501 = vld [vmem:[%s208 + $0x40] sm:$0xf]
        %v502 = vld [vmem:[%s208 + $0x44] sm:$0xf]
        %v503 = vld [vmem:[%s208 + $0x48] sm:$0xf]
        %v504 = vld [vmem:[%s208 + $0x4c] sm:$0xf]
        %v505 = vld [vmem:[%s208 + $0x50] sm:$0xf]
        %v506 = vld [vmem:[%s208 + $0x54] sm:$0xf]
        %v507 = vld [vmem:[%s208 + $0x58] sm:$0xf]
        %v508 = vld [vmem:[%s208 + $0x5c] sm:$0xf]
        %v509 = vld [vmem:[%s208 + $0x60] sm:$0xf]
        %v510 = vld [vmem:[%s208 + $0x64] sm:$0xf]
        %v511 = vld [vmem:[%s208 + $0x68] sm:$0xf]
        %v512 = vld [vmem:[%s208 + $0x6c] sm:$0xf]
        %v513 = vld [vmem:[%s208 + $0x70] sm:$0xf]
        %v514 = vld [vmem:[%s208 + $0x74] sm:$0xf]
        %v515 = vld [vmem:[%s208 + $0x78] sm:$0xf]
        %v516 = vld [vmem:[%s208 + $0x7c] sm:$0xf]
        %v517 = vld [vmem:[%s208 + $0x80] sm:$0xf]
        %v518 = vld [vmem:[%s208 + $0x84] sm:$0xf]
        %v519 = vld [vmem:[%s208 + $0x88] sm:$0xf]
        %v520 = vld [vmem:[%s208 + $0x8c] sm:$0xf]
        %v521 = vld [vmem:[%s208 + $0x90] sm:$0xf]
        %v522 = vld [vmem:[%s208 + $0x94] sm:$0xf]
        %v523 = vld [vmem:[%s208 + $0x98] sm:$0xf]
        %v524 = vld [vmem:[%s208 + $0x9c] sm:$0xf]
        %v525 = vld [vmem:[%s208 + $0xa0] sm:$0xf]
        %v526 = vld [vmem:[%s208 + $0xa4] sm:$0xf]
        %v527 = vld [vmem:[%s208 + $0xa8] sm:$0xf]
        %v528 = vld [vmem:[%s208 + $0xac] sm:$0xf]
        %v529 = vld [vmem:[%s208 + $0xb0] sm:$0xf]
        %v530 = vld [vmem:[%s208 + $0xb4] sm:$0xf]
        %v531 = vld [vmem:[%s208 + $0xb8] sm:$0xf]
        %v532 = vld [vmem:[%s208 + $0xbc] sm:$0xf]
        %v533 = vld [vmem:[%s208 + $0xc0] sm:$0xf]
        %v534 = vld [vmem:[%s208 + $0xc4] sm:$0xf]
        %v535 = vld [vmem:[%s208 + $0xc8] sm:$0xf]
        %v536 = vld [vmem:[%s208 + $0xcc] sm:$0xf]
        %v537 = vld [vmem:[%s208 + $0xd0] sm:$0xf]
        %v538 = vld [vmem:[%s208 + $0xd4] sm:$0xf]
        %v539 = vld [vmem:[%s208 + $0xd8] sm:$0xf]
        %v540 = vld [vmem:[%s208 + $0xdc] sm:$0xf]
        %v541 = vld [vmem:[%s208 + $0xe0] sm:$0xf]
        %v542 = vld [vmem:[%s208 + $0xe4] sm:$0xf]
        %v543 = vld [vmem:[%s208 + $0xe8] sm:$0xf]
        %v544 = vld [vmem:[%s208 + $0xec] sm:$0xf]
        %v545 = vld [vmem:[%s208 + $0xf0] sm:$0xf]
        %v546 = vld [vmem:[%s208 + $0xf4] sm:$0xf]
        %v547 = vld [vmem:[%s208 + $0xf8] sm:$0xf]
        %v548 = vld [vmem:[%s208 + $0xfc] sm:$0xf]
        %v549 = vld [vmem:[%s208 + $0x100] sm:$0xf]
        %v550 = vld [vmem:[%s208 + $0x104] sm:$0xf]
        %v551 = vld [vmem:[%s208 + $0x108] sm:$0xf]
        %v552 = vld [vmem:[%s208 + $0x10c] sm:$0xf]
        %v553 = vld [vmem:[%s208 + $0x110] sm:$0xf]
        %v554 = vld [vmem:[%s208 + $0x114] sm:$0xf]
        %v555 = vld [vmem:[%s208 + $0x118] sm:$0xf]
        %v556 = vld [vmem:[%s208 + $0x11c] sm:$0xf]
        %v557 = vld [vmem:[%s208 + $0x120] sm:$0xf]
        %v558 = vld [vmem:[%s208 + $0x124] sm:$0xf]
        %v559 = vld [vmem:[%s208 + $0x128] sm:$0xf]
        %v560 = vld [vmem:[%s208 + $0x12c] sm:$0xf]
        %v561 = vld [vmem:[%s208 + $0x130] sm:$0xf]
        %v562 = vld [vmem:[%s208 + $0x134] sm:$0xf]
        %v563 = vld [vmem:[%s208 + $0x138] sm:$0xf]
        %v564 = vld [vmem:[%s208 + $0x13c] sm:$0xf]
        %v565 = vld [vmem:[%s208 + $0x140] sm:$0xf]
        %v566 = vld [vmem:[%s208 + $0x144] sm:$0xf]
        %v567 = vld [vmem:[%s208 + $0x148] sm:$0xf]
        %v568 = vld [vmem:[%s208 + $0x14c] sm:$0xf]
        %v569 = vld [vmem:[%s208 + $0x150] sm:$0xf]
        %v570 = vld [vmem:[%s208 + $0x154] sm:$0xf]
        %v571 = vld [vmem:[%s208 + $0x158] sm:$0xf]
        %v572 = vld [vmem:[%s208 + $0x15c] sm:$0xf]
        %v573 = vld [vmem:[%s208 + $0x160] sm:$0xf]
        %v574 = vld [vmem:[%s208 + $0x164] sm:$0xf]
        %v575 = vld [vmem:[%s208 + $0x168] sm:$0xf]
        %v576 = vld [vmem:[%s208 + $0x16c] sm:$0xf]
        %v577 = vld [vmem:[%s208 + $0x170] sm:$0xf]
        %v578 = vld [vmem:[%s208 + $0x174] sm:$0xf]
        %v579 = vld [vmem:[%s208 + $0x178] sm:$0xf]
        %v580 = vld [vmem:[%s208 + $0x17c] sm:$0xf]
        %v581 = vld [vmem:[%s208 + $0x180] sm:$0xf]
        %v582 = vld [vmem:[%s208 + $0x184] sm:$0xf]
        %v583 = vld [vmem:[%s208 + $0x188] sm:$0xf]
        %v584 = vld [vmem:[%s208 + $0x18c] sm:$0xf]
        %v585 = vld [vmem:[%s208 + $0x190] sm:$0xf]
        %v586 = vld [vmem:[%s208 + $0x194] sm:$0xf]
        %v587 = vld [vmem:[%s208 + $0x198] sm:$0xf]
        %v588 = vld [vmem:[%s208 + $0x19c] sm:$0xf]
        %v589 = vld [vmem:[%s208 + $0x1a0] sm:$0xf]
        %v590 = vld [vmem:[%s208 + $0x1a4] sm:$0xf]
        %v591 = vld [vmem:[%s208 + $0x1a8] sm:$0xf]
        %v592 = vld [vmem:[%s208 + $0x1ac] sm:$0xf]
        %v593 = vld [vmem:[%s208 + $0x1b0] sm:$0xf]
        %v594 = vld [vmem:[%s208 + $0x1b4] sm:$0xf]
        %v595 = vld [vmem:[%s208 + $0x1b8] sm:$0xf]
        %v596 = vld [vmem:[%s208 + $0x1bc] sm:$0xf]
        %v597 = vld [vmem:[%s208 + $0x1c0] sm:$0xf]
        %v598 = vld [vmem:[%s208 + $0x1c4] sm:$0xf]
        %v599 = vld [vmem:[%s208 + $0x1c8] sm:$0xf]
        %v600 = vld [vmem:[%s208 + $0x1cc] sm:$0xf]
        %v601 = vld [vmem:[%s208 + $0x1d0] sm:$0xf]
        %v602 = vld [vmem:[%s208 + $0x1d4] sm:$0xf]
        %v603 = vld [vmem:[%s208 + $0x1d8] sm:$0xf]
        %v604 = vld [vmem:[%s208 + $0x1dc] sm:$0xf]
        %v605 = vld [vmem:[%s208 + $0x1e0] sm:$0xf]
        %v606 = vld [vmem:[%s208 + $0x1e4] sm:$0xf]
        %v607 = vld [vmem:[%s208 + $0x1e8] sm:$0xf]
        %v608 = vld [vmem:[%s208 + $0x1ec] sm:$0xf]
        %v609 = vld [vmem:[%s208 + $0x1f0] sm:$0xf]
        %v610 = vld [vmem:[%s208 + $0x1f4] sm:$0xf]
        %v611 = vld [vmem:[%s208 + $0x1f8] sm:$0xf]
        %v612 = vld [vmem:[%s208 + $0x1fc] sm:$0xf]
        %v613 = vld [vmem:[%s214] sm:$0xf]
        %v614 = vld [vmem:[%s214 + $0x4] sm:$0xf]
        %v615 = vld [vmem:[%s214 + $0x8] sm:$0xf]
        %v616 = vld [vmem:[%s214 + $0xc] sm:$0x3]
        %v745 = vunpack.c.l.b16 %v485
        %v746 = vunpack.c.l.b16 %v486
        %v747 = vunpack.c.l.b16 %v487
        %v748 = vunpack.c.l.b16 %v488
        %v749 = vunpack.c.l.b16 %v489
        %v750 = vunpack.c.l.b16 %v490
        %v751 = vunpack.c.l.b16 %v491
        %v752 = vunpack.c.l.b16 %v492
        %v753 = vunpack.c.l.b16 %v493
        %v754 = vunpack.c.l.b16 %v494
        %v755 = vunpack.c.l.b16 %v495
        %v756 = vunpack.c.l.b16 %v496
        %v757 = vunpack.c.l.b16 %v497
        %v758 = vunpack.c.l.b16 %v498
        %v759 = vunpack.c.l.b16 %v499
        %v760 = vunpack.c.l.b16 %v500
        %v761 = vunpack.c.l.b16 %v501
        %v762 = vunpack.c.l.b16 %v502
        %v763 = vunpack.c.l.b16 %v503
        %v764 = vunpack.c.l.b16 %v504
        %v765 = vunpack.c.l.b16 %v505
        %v766 = vunpack.c.l.b16 %v506
        %v767 = vunpack.c.l.b16 %v507
        %v768 = vunpack.c.l.b16 %v508
        %v769 = vunpack.c.l.b16 %v509
        %v770 = vunpack.c.l.b16 %v510
        %v771 = vunpack.c.l.b16 %v511
        %v772 = vunpack.c.l.b16 %v512
        %v773 = vunpack.c.l.b16 %v513
        %v774 = vunpack.c.l.b16 %v514
        %v775 = vunpack.c.l.b16 %v515
        %v776 = vunpack.c.l.b16 %v516
        %v777 = vunpack.c.l.b16 %v517
        %v778 = vunpack.c.l.b16 %v518
        %v779 = vunpack.c.l.b16 %v519
        %v780 = vunpack.c.l.b16 %v520
        %v781 = vunpack.c.l.b16 %v521
        %v782 = vunpack.c.l.b16 %v522
        %v783 = vunpack.c.l.b16 %v523
        %v784 = vunpack.c.l.b16 %v524
        %v785 = vunpack.c.l.b16 %v525
        %v786 = vunpack.c.l.b16 %v526
        %v787 = vunpack.c.l.b16 %v527
        %v788 = vunpack.c.l.b16 %v528
        %v789 = vunpack.c.l.b16 %v529
        %v790 = vunpack.c.l.b16 %v530
        %v791 = vunpack.c.l.b16 %v531
        %v792 = vunpack.c.l.b16 %v532
        %v793 = vunpack.c.l.b16 %v533
        %v794 = vunpack.c.l.b16 %v534
        %v795 = vunpack.c.l.b16 %v535
        %v796 = vunpack.c.l.b16 %v536
        %v797 = vunpack.c.l.b16 %v537
        %v798 = vunpack.c.l.b16 %v538
        %v799 = vunpack.c.l.b16 %v539
        %v800 = vunpack.c.l.b16 %v540
        %v801 = vunpack.c.l.b16 %v541
        %v802 = vunpack.c.l.b16 %v542
        %v803 = vunpack.c.l.b16 %v543
        %v804 = vunpack.c.l.b16 %v544
        %v805 = vunpack.c.l.b16 %v545
        %v806 = vunpack.c.l.b16 %v546
        %v807 = vunpack.c.l.b16 %v547
        %v808 = vunpack.c.l.b16 %v548
        %v809 = vunpack.c.l.b16 %v549
        %v810 = vunpack.c.l.b16 %v550
        %v811 = vunpack.c.l.b16 %v551
        %v812 = vunpack.c.l.b16 %v552
        %v813 = vunpack.c.l.b16 %v553
        %v814 = vunpack.c.l.b16 %v554
        %v815 = vunpack.c.l.b16 %v555
        %v816 = vunpack.c.l.b16 %v556
        %v817 = vunpack.c.l.b16 %v557
        %v818 = vunpack.c.l.b16 %v558
        %v819 = vunpack.c.l.b16 %v559
        %v820 = vunpack.c.l.b16 %v560
        %v821 = vunpack.c.l.b16 %v561
        %v822 = vunpack.c.l.b16 %v562
        %v823 = vunpack.c.l.b16 %v563
        %v824 = vunpack.c.l.b16 %v564
        %v825 = vunpack.c.l.b16 %v565
        %v826 = vunpack.c.l.b16 %v566
        %v827 = vunpack.c.l.b16 %v567
        %v828 = vunpack.c.l.b16 %v568
        %v829 = vunpack.c.l.b16 %v569
        %v830 = vunpack.c.l.b16 %v570
        %v831 = vunpack.c.l.b16 %v571
        %v832 = vunpack.c.l.b16 %v572
        %v833 = vunpack.c.l.b16 %v573
        %v834 = vunpack.c.l.b16 %v574
        %v835 = vunpack.c.l.b16 %v575
        %v836 = vunpack.c.l.b16 %v576
        %v837 = vunpack.c.l.b16 %v577
        %v838 = vunpack.c.l.b16 %v578
        %v839 = vunpack.c.l.b16 %v579
        %v840 = vunpack.c.l.b16 %v580
        %v841 = vunpack.c.l.b16 %v581
        %v842 = vunpack.c.l.b16 %v582
        %v843 = vunpack.c.l.b16 %v583
        %v844 = vunpack.c.l.b16 %v584
        %v845 = vunpack.c.l.b16 %v585
        %v846 = vunpack.c.l.b16 %v586
        %v847 = vunpack.c.l.b16 %v587
        %v848 = vunpack.c.l.b16 %v588
        %v849 = vunpack.c.l.b16 %v589
        %v850 = vunpack.c.l.b16 %v590
        %v851 = vunpack.c.l.b16 %v591
        %v852 = vunpack.c.l.b16 %v592
        %v853 = vunpack.c.l.b16 %v593
        %v854 = vunpack.c.l.b16 %v594
        %v855 = vunpack.c.l.b16 %v595
        %v856 = vunpack.c.l.b16 %v596
        %v857 = vunpack.c.l.b16 %v597
        %v858 = vunpack.c.l.b16 %v598
        %v859 = vunpack.c.l.b16 %v599
        %v860 = vunpack.c.l.b16 %v600
        %v861 = vunpack.c.l.b16 %v601
        %v862 = vunpack.c.l.b16 %v602
        %v863 = vunpack.c.l.b16 %v603
        %v864 = vunpack.c.l.b16 %v604
        %v865 = vunpack.c.l.b16 %v605
        %v866 = vunpack.c.l.b16 %v606
        %v867 = vunpack.c.l.b16 %v607
        %v868 = vunpack.c.l.b16 %v608
        %v869 = vunpack.c.l.b16 %v609
        %v870 = vunpack.c.l.b16 %v610
        %v871 = vunpack.c.l.b16 %v611
        %v872 = vunpack.c.l.b16 %v612
        %v873 = vpack.c.b16 %v746, %v745
        %v874 = vpack.c.b16 %v748, %v747
        %v875 = vpack.c.b16 %v750, %v749
        %v876 = vpack.c.b16 %v752, %v751
        %v877 = vpack.c.b16 %v754, %v753
        %v878 = vpack.c.b16 %v756, %v755
        %v879 = vpack.c.b16 %v758, %v757
        %v880 = vpack.c.b16 %v760, %v759
        %v881 = vpack.c.b16 %v762, %v761
        %v882 = vpack.c.b16 %v764, %v763
        %v883 = vpack.c.b16 %v766, %v765
        %v884 = vpack.c.b16 %v768, %v767
        %v885 = vpack.c.b16 %v770, %v769
        %v886 = vpack.c.b16 %v772, %v771
        %v887 = vpack.c.b16 %v774, %v773
        %v888 = vpack.c.b16 %v776, %v775
        %v889 = vpack.c.b16 %v778, %v777
        %v890 = vpack.c.b16 %v780, %v779
        %v891 = vpack.c.b16 %v782, %v781
        %v892 = vpack.c.b16 %v784, %v783
        %v893 = vpack.c.b16 %v786, %v785
        %v894 = vpack.c.b16 %v788, %v787
        %v895 = vpack.c.b16 %v790, %v789
        %v896 = vpack.c.b16 %v792, %v791
        %v897 = vpack.c.b16 %v794, %v793
        %v898 = vpack.c.b16 %v796, %v795
        %v899 = vpack.c.b16 %v798, %v797
        %v900 = vpack.c.b16 %v800, %v799
        %v901 = vpack.c.b16 %v802, %v801
        %v902 = vpack.c.b16 %v804, %v803
        %v903 = vpack.c.b16 %v806, %v805
        %v904 = vpack.c.b16 %v808, %v807
        %v905 = vpack.c.b16 %v810, %v809
        %v906 = vpack.c.b16 %v812, %v811
        %v907 = vpack.c.b16 %v814, %v813
        %v908 = vpack.c.b16 %v816, %v815
        %v909 = vpack.c.b16 %v818, %v817
        %v910 = vpack.c.b16 %v820, %v819
        %v911 = vpack.c.b16 %v822, %v821
        %v912 = vpack.c.b16 %v824, %v823
        %v913 = vpack.c.b16 %v826, %v825
        %v914 = vpack.c.b16 %v828, %v827
        %v915 = vpack.c.b16 %v830, %v829
        %v916 = vpack.c.b16 %v832, %v831
        %v917 = vpack.c.b16 %v834, %v833
        %v918 = vpack.c.b16 %v836, %v835
        %v919 = vpack.c.b16 %v838, %v837
        %v920 = vpack.c.b16 %v840, %v839
        %v921 = vpack.c.b16 %v842, %v841
        %v922 = vpack.c.b16 %v844, %v843
        %v923 = vpack.c.b16 %v846, %v845
        %v924 = vpack.c.b16 %v848, %v847
        %v925 = vpack.c.b16 %v850, %v849
        %v926 = vpack.c.b16 %v852, %v851
        %v927 = vpack.c.b16 %v854, %v853
        %v928 = vpack.c.b16 %v856, %v855
        %v929 = vpack.c.b16 %v858, %v857
        %v930 = vpack.c.b16 %v860, %v859
        %v931 = vpack.c.b16 %v862, %v861
        %v932 = vpack.c.b16 %v864, %v863
        %v933 = vpack.c.b16 %v866, %v865
        %v934 = vpack.c.b16 %v868, %v867
        %v935 = vpack.c.b16 %v870, %v869
        %v936 = vpack.c.b16 %v872, %v871
        %v941 = vunpack.c.l.b16 %v613
        %v942 = vunpack.c.l.b16 %v614
        %v943 = vunpack.c.l.b16 %v615
        %v944 = vunpack.c.l.b16 %v616
        %v945 = vpack.c.b16 %v942, %v941
        %v946 = vpack.c.b16 %v944, %v943
        %vm948 = vcmask 220160
        %v950 = vsel %vm948, %v873, 0
        %v953 = vsel %vm948, %v874, 0
        %v956 = vsel %vm948, %v875, 0
        %v959 = vsel %vm948, %v876, 0
        %v962 = vsel %vm948, %v877, 0
        %v965 = vsel %vm948, %v878, 0
        %v968 = vsel %vm948, %v879, 0
        %v971 = vsel %vm948, %v880, 0
        %v974 = vsel %vm948, %v881, 0
        %v977 = vsel %vm948, %v882, 0
        %v980 = vsel %vm948, %v883, 0
        %v983 = vsel %vm948, %v884, 0
        %v986 = vsel %vm948, %v885, 0
        %v989 = vsel %vm948, %v886, 0
        %v992 = vsel %vm948, %v887, 0
        %v995 = vsel %vm948, %v888, 0
        %v998 = vsel %vm948, %v889, 0
        %v1001 = vsel %vm948, %v890, 0
        %v1004 = vsel %vm948, %v891, 0
        %v1007 = vsel %vm948, %v892, 0
        %v1010 = vsel %vm948, %v893, 0
        %v1013 = vsel %vm948, %v894, 0
        %v1016 = vsel %vm948, %v895, 0
        %v1019 = vsel %vm948, %v896, 0
        %v1022 = vsel %vm948, %v897, 0
        %v1025 = vsel %vm948, %v898, 0
        %v1028 = vsel %vm948, %v899, 0
        %v1031 = vsel %vm948, %v900, 0
        %v1034 = vsel %vm948, %v901, 0
        %v1037 = vsel %vm948, %v902, 0
        %v1040 = vsel %vm948, %v903, 0
        %v1043 = vsel %vm948, %v904, 0
        %v1046 = vsel %vm948, %v905, 0
        %v1049 = vsel %vm948, %v906, 0
        %v1052 = vsel %vm948, %v907, 0
        %v1055 = vsel %vm948, %v908, 0
        %v1058 = vsel %vm948, %v909, 0
        %v1061 = vsel %vm948, %v910, 0
        %v1064 = vsel %vm948, %v911, 0
        %v1067 = vsel %vm948, %v912, 0
        %v1070 = vsel %vm948, %v913, 0
        %v1073 = vsel %vm948, %v914, 0
        %v1076 = vsel %vm948, %v915, 0
        %v1079 = vsel %vm948, %v916, 0
        %v1082 = vsel %vm948, %v917, 0
        %v1085 = vsel %vm948, %v918, 0
        %v1088 = vsel %vm948, %v919, 0
        %v1091 = vsel %vm948, %v920, 0
        %v1094 = vsel %vm948, %v921, 0
        %v1097 = vsel %vm948, %v922, 0
        %v1100 = vsel %vm948, %v923, 0
        %v1103 = vsel %vm948, %v924, 0
        %v1106 = vsel %vm948, %v925, 0
        %v1109 = vsel %vm948, %v926, 0
        %v1112 = vsel %vm948, %v927, 0
        %v1115 = vsel %vm948, %v928, 0
        %v1118 = vsel %vm948, %v929, 0
        %v1121 = vsel %vm948, %v930, 0
        %v1124 = vsel %vm948, %v931, 0
        %v1127 = vsel %vm948, %v932, 0
        %v1130 = vsel %vm948, %v933, 0
        %v1133 = vsel %vm948, %v934, 0
        %v1136 = vsel %vm948, %v935, 0
        %v1139 = vsel %vm948, %v936, 0
        %vm1141 = vcmask 1044480
        %vm1142 = vcmask 1045504
        %v1143 = vsel %vm1141, 4294967295, 65535
        %v1144 = vsel %vm1142, %v1143, 0
        %v1146 = vand.u32 %v946, %v1144
        %1148 = vmatprep.subr.bf16.mxu0 0
        %1149 = vmatpush1.bf16.msra.mxu0 %v945
        %1150 = vmatprep.subr.bf16.mxu0 0
        %1151 = vmatpush1.bf16.msra.mxu0 %v1146
        %1152 = vmatprep.subr.bf16.mxu0 0
        %1153 = vmatpush1.bf16.msra.mxu0 0
        %1154 = vmatprep.subr.bf16.mxu0 0
        %1155 = vmatpush1.bf16.msra.mxu0 0
        %1156 = vmatprep.subr.bf16.mxu0 0
        %1157 = vmatpush1.bf16.msra.mxu0 0
        %1158 = vmatprep.subr.bf16.mxu0 0
        %1159 = vmatpush1.bf16.msra.mxu0 0
        %1160 = vmatprep.subr.bf16.mxu0 0
        %1161 = vmatpush1.bf16.msra.mxu0 0
        %1162 = vmatprep.subr.bf16.mxu0 0
        %1163 = vmatpush1.bf16.msra.mxu0 0
        %1164 = vmatprep.subr.bf16.mxu0 0
        %1165 = vmatpush1.bf16.msra.mxu0 0
        %1166 = vmatprep.subr.bf16.mxu0 0
        %1167 = vmatpush1.bf16.msra.mxu0 0
        %1168 = vmatprep.subr.bf16.mxu0 0
        %1169 = vmatpush1.bf16.msra.mxu0 0
        %1170 = vmatprep.subr.bf16.mxu0 0
        %1171 = vmatpush1.bf16.msra.mxu0 0
        %1172 = vmatprep.subr.bf16.mxu0 0
        %1173 = vmatpush1.bf16.msra.mxu0 0
        %1174 = vmatprep.subr.bf16.mxu0 0
        %1175 = vmatpush1.bf16.msra.mxu0 0
        %1176 = vmatprep.subr.bf16.mxu0 0
        %1177 = vmatpush1.bf16.msra.mxu0 0
        %1178 = vmatprep.subr.bf16.mxu0 0
        %1179 = vmatpush1.bf16.msra.mxu0 0
        %1180 = vmatprep.mubr.bf16.mxu0 0
        %1181 = vmatmul.mubr.bf16.gmra.mrb[0].mxu0 %v950
        %v1182 = vpop.f32.mrb[0].mxu0
        %v1183 = vadd.f32 0.0, %v1182
        %v1184 = vpop.f32.mrb[0].mxu0
        %v1185 = vpop.f32.mrb[0].mxu0
        %v1186 = vadd.f32 0.0, %v1185
        %v1187 = vpop.f32.mrb[0].mxu0
        %1188 = vmatprep.mubr.bf16.mxu0 0
        %1189 = vmatmul.mubr.bf16.gmra.mrb[0].mxu0 %v953
        %v1190 = vpop.f32.mrb[0].mxu0
        %v1191 = vadd.f32 0.0, %v1190
        %v1192 = vpop.f32.mrb[0].mxu0
        %v1193 = vpop.f32.mrb[0].mxu0
        %v1194 = vadd.f32 0.0, %v1193
        %v1195 = vpop.f32.mrb[0].mxu0
        %1196 = vmatprep.mubr.bf16.mxu0 0
        %1197 = vmatmul.mubr.bf16.gmra.mrb[0].mxu0 %v956
        %v1198 = vpop.f32.mrb[0].mxu0
        %v1199 = vadd.f32 0.0, %v1198
        %v1200 = vpop.f32.mrb[0].mxu0
        %v1201 = vpop.f32.mrb[0].mxu0
        %v1202 = vadd.f32 0.0, %v1201
        %v1203 = vpop.f32.mrb[0].mxu0
        %1204 = vmatprep.mubr.bf16.mxu0 0
        %1205 = vmatmul.mubr.bf16.gmra.mrb[0].mxu0 %v959
        %v1206 = vpop.f32.mrb[0].mxu0
        %v1207 = vadd.f32 0.0, %v1206
        %v1208 = vpop.f32.mrb[0].mxu0
        %v1209 = vpop.f32.mrb[0].mxu0
        %v1210 = vadd.f32 0.0, %v1209
        %v1211 = vpop.f32.mrb[0].mxu0
        %1212 = vmatprep.mubr.bf16.mxu0 0
        %1213 = vmatmul.mubr.bf16.gmra.mrb[0].mxu0 %v962
        %v1214 = vpop.f32.mrb[0].mxu0
        %v1215 = vadd.f32 0.0, %v1214
        %v1216 = vpop.f32.mrb[0].mxu0
        %v1217 = vpop.f32.mrb[0].mxu0
        %v1218 = vadd.f32 0.0, %v1217
        %v1219 = vpop.f32.mrb[0].mxu0
        %1220 = vmatprep.mubr.bf16.mxu0 0
        %1221 = vmatmul.mubr.bf16.gmra.mrb[0].mxu0 %v965
        %v1222 = vpop.f32.mrb[0].mxu0
        %v1223 = vadd.f32 0.0, %v1222
        %v1224 = vpop.f32.mrb[0].mxu0
        %v1225 = vpop.f32.mrb[0].mxu0
        %v1226 = vadd.f32 0.0, %v1225
        %v1227 = vpop.f32.mrb[0].mxu0
        %1228 = vmatprep.mubr.bf16.mxu0 0
        %1229 = vmatmul.mubr.bf16.gmra.mrb[0].mxu0 %v968
        %v1230 = vpop.f32.mrb[0].mxu0
        %v1231 = vadd.f32 0.0, %v1230
        %v1232 = vpop.f32.mrb[0].mxu0
        %v1233 = vpop.f32.mrb[0].mxu0
        %v1234 = vadd.f32 0.0, %v1233
        %v1235 = vpop.f32.mrb[0].mxu0
        %1236 = vmatprep.mubr.bf16.mxu0 0
        %1237 = vmatmul.mubr.bf16.gmra.mrb[0].mxu0 %v971
        %v1238 = vpop.f32.mrb[0].mxu0
        %v1239 = vadd.f32 0.0, %v1238
        %v1240 = vpop.f32.mrb[0].mxu0
        %v1241 = vpop.f32.mrb[0].mxu0
        %v1242 = vadd.f32 0.0, %v1241
        %v1243 = vpop.f32.mrb[0].mxu0
        %1244 = vmatprep.mubr.bf16.mxu0 0
        %1245 = vmatmul.mubr.bf16.gmra.mrb[0].mxu0 %v974
        %v1246 = vpop.f32.mrb[0].mxu0
        %v1247 = vadd.f32 0.0, %v1246
        %v1248 = vpop.f32.mrb[0].mxu0
        %v1249 = vpop.f32.mrb[0].mxu0
        %v1250 = vadd.f32 0.0, %v1249
        %v1251 = vpop.f32.mrb[0].mxu0
        %1252 = vmatprep.mubr.bf16.mxu0 0
        %1253 = vmatmul.mubr.bf16.gmra.mrb[0].mxu0 %v977
        %v1254 = vpop.f32.mrb[0].mxu0
        %v1255 = vadd.f32 0.0, %v1254
        %v1256 = vpop.f32.mrb[0].mxu0
        %v1257 = vpop.f32.mrb[0].mxu0
        %v1258 = vadd.f32 0.0, %v1257
        %v1259 = vpop.f32.mrb[0].mxu0
        %1260 = vmatprep.mubr.bf16.mxu0 0
        %1261 = vmatmul.mubr.bf16.gmra.mrb[0].mxu0 %v980
        %v1262 = vpop.f32.mrb[0].mxu0
        %v1263 = vadd.f32 0.0, %v1262
        %v1264 = vpop.f32.mrb[0].mxu0
        %v1265 = vpop.f32.mrb[0].mxu0
        %v1266 = vadd.f32 0.0, %v1265
        %v1267 = vpop.f32.mrb[0].mxu0
        %1268 = vmatprep.mubr.bf16.mxu0 0
        %1269 = vmatmul.mubr.bf16.gmra.mrb[0].mxu0 %v983
        %v1270 = vpop.f32.mrb[0].mxu0
        %v1271 = vadd.f32 0.0, %v1270
        %v1272 = vpop.f32.mrb[0].mxu0
        %v1273 = vpop.f32.mrb[0].mxu0
        %v1274 = vadd.f32 0.0, %v1273
        %v1275 = vpop.f32.mrb[0].mxu0
        %1276 = vmatprep.mubr.bf16.mxu0 0
        %1277 = vmatmul.mubr.bf16.gmra.mrb[0].mxu0 %v986
        %v1278 = vpop.f32.mrb[0].mxu0
        %v1279 = vadd.f32 0.0, %v1278
        %v1280 = vpop.f32.mrb[0].mxu0
        %v1281 = vpop.f32.mrb[0].mxu0
        %v1282 = vadd.f32 0.0, %v1281
        %v1283 = vpop.f32.mrb[0].mxu0
        %1284 = vmatprep.mubr.bf16.mxu0 0
        %1285 = vmatmul.mubr.bf16.gmra.mrb[0].mxu0 %v989
        %v1286 = vpop.f32.mrb[0].mxu0
        %v1287 = vadd.f32 0.0, %v1286
        %v1288 = vpop.f32.mrb[0].mxu0
        %v1289 = vpop.f32.mrb[0].mxu0
        %v1290 = vadd.f32 0.0, %v1289
        %v1291 = vpop.f32.mrb[0].mxu0
        %1292 = vmatprep.mubr.bf16.mxu0 0
        %1293 = vmatmul.mubr.bf16.gmra.mrb[0].mxu0 %v992
        %v1294 = vpop.f32.mrb[0].mxu0
        %v1295 = vadd.f32 0.0, %v1294
        %v1296 = vpop.f32.mrb[0].mxu0
        %v1297 = vpop.f32.mrb[0].mxu0
        %v1298 = vadd.f32 0.0, %v1297
        %v1299 = vpop.f32.mrb[0].mxu0
        %1300 = vmatprep.mubr.bf16.mxu0 0
        %1301 = vmatmul.mubr.bf16.gmra.mrb[0].mxu0 %v995
        %v1302 = vpop.f32.mrb[0].mxu0
        %v1303 = vadd.f32 0.0, %v1302
        %v1304 = vpop.f32.mrb[0].mxu0
        %v1305 = vpop.f32.mrb[0].mxu0
        %v1306 = vadd.f32 0.0, %v1305
        %v1307 = vpop.f32.mrb[0].mxu0
        %1308 = vmatprep.mubr.bf16.mxu0 0
        %1309 = vmatmul.mubr.bf16.gmra.mrb[0].mxu0 %v998
        %v1310 = vpop.f32.mrb[0].mxu0
        %v1311 = vadd.f32 0.0, %v1310
        %v1312 = vpop.f32.mrb[0].mxu0
        %v1313 = vpop.f32.mrb[0].mxu0
        %v1314 = vadd.f32 0.0, %v1313
        %v1315 = vpop.f32.mrb[0].mxu0
        %1316 = vmatprep.mubr.bf16.mxu0 0
        %1317 = vmatmul.mubr.bf16.gmra.mrb[0].mxu0 %v1001
        %v1318 = vpop.f32.mrb[0].mxu0
        %v1319 = vadd.f32 0.0, %v1318
        %v1320 = vpop.f32.mrb[0].mxu0
        %v1321 = vpop.f32.mrb[0].mxu0
        %v1322 = vadd.f32 0.0, %v1321
        %v1323 = vpop.f32.mrb[0].mxu0
        %1324 = vmatprep.mubr.bf16.mxu0 0
        %1325 = vmatmul.mubr.bf16.gmra.mrb[0].mxu0 %v1004
        %v1326 = vpop.f32.mrb[0].mxu0
        %v1327 = vadd.f32 0.0, %v1326
        %v1328 = vpop.f32.mrb[0].mxu0
        %v1329 = vpop.f32.mrb[0].mxu0
        %v1330 = vadd.f32 0.0, %v1329
        %v1331 = vpop.f32.mrb[0].mxu0
        %1332 = vmatprep.mubr.bf16.mxu0 0
        %1333 = vmatmul.mubr.bf16.gmra.mrb[0].mxu0 %v1007
        %v1334 = vpop.f32.mrb[0].mxu0
        %v1335 = vadd.f32 0.0, %v1334
        %v1336 = vpop.f32.mrb[0].mxu0
        %v1337 = vpop.f32.mrb[0].mxu0
        %v1338 = vadd.f32 0.0, %v1337
        %v1339 = vpop.f32.mrb[0].mxu0
        %1340 = vmatprep.mubr.bf16.mxu0 0
        %1341 = vmatmul.mubr.bf16.gmra.mrb[0].mxu0 %v1010
        %v1342 = vpop.f32.mrb[0].mxu0
        %v1343 = vadd.f32 0.0, %v1342
        %v1344 = vpop.f32.mrb[0].mxu0
        %v1345 = vpop.f32.mrb[0].mxu0
        %v1346 = vadd.f32 0.0, %v1345
        %v1347 = vpop.f32.mrb[0].mxu0
        %1348 = vmatprep.mubr.bf16.mxu0 0
        %1349 = vmatmul.mubr.bf16.gmra.mrb[0].mxu0 %v1013
        %v1350 = vpop.f32.mrb[0].mxu0
        %v1351 = vadd.f32 0.0, %v1350
        %v1352 = vpop.f32.mrb[0].mxu0
        %v1353 = vpop.f32.mrb[0].mxu0
        %v1354 = vadd.f32 0.0, %v1353
        %v1355 = vpop.f32.mrb[0].mxu0
        %1356 = vmatprep.mubr.bf16.mxu0 0
        %1357 = vmatmul.mubr.bf16.gmra.mrb[0].mxu0 %v1016
        %v1358 = vpop.f32.mrb[0].mxu0
        %v1359 = vadd.f32 0.0, %v1358
        %v1360 = vpop.f32.mrb[0].mxu0
        %v1361 = vpop.f32.mrb[0].mxu0
        %v1362 = vadd.f32 0.0, %v1361
        %v1363 = vpop.f32.mrb[0].mxu0
        %1364 = vmatprep.mubr.bf16.mxu0 0
        %1365 = vmatmul.mubr.bf16.gmra.mrb[0].mxu0 %v1019
        %v1366 = vpop.f32.mrb[0].mxu0
        %v1367 = vadd.f32 0.0, %v1366
        %v1368 = vpop.f32.mrb[0].mxu0
        %v1369 = vpop.f32.mrb[0].mxu0
        %v1370 = vadd.f32 0.0, %v1369
        %v1371 = vpop.f32.mrb[0].mxu0
        %1372 = vmatprep.mubr.bf16.mxu0 0
        %1373 = vmatmul.mubr.bf16.gmra.mrb[0].mxu0 %v1022
        %v1374 = vpop.f32.mrb[0].mxu0
        %v1375 = vadd.f32 0.0, %v1374
        %v1376 = vpop.f32.mrb[0].mxu0
        %v1377 = vpop.f32.mrb[0].mxu0
        %v1378 = vadd.f32 0.0, %v1377
        %v1379 = vpop.f32.mrb[0].mxu0
        %1380 = vmatprep.mubr.bf16.mxu0 0
        %1381 = vmatmul.mubr.bf16.gmra.mrb[0].mxu0 %v1025
        %v1382 = vpop.f32.mrb[0].mxu0
        %v1383 = vadd.f32 0.0, %v1382
        %v1384 = vpop.f32.mrb[0].mxu0
        %v1385 = vpop.f32.mrb[0].mxu0
        %v1386 = vadd.f32 0.0, %v1385
        %v1387 = vpop.f32.mrb[0].mxu0
        %1388 = vmatprep.mubr.bf16.mxu0 0
        %1389 = vmatmul.mubr.bf16.gmra.mrb[0].mxu0 %v1028
        %v1390 = vpop.f32.mrb[0].mxu0
        %v1391 = vadd.f32 0.0, %v1390
        %v1392 = vpop.f32.mrb[0].mxu0
        %v1393 = vpop.f32.mrb[0].mxu0
        %v1394 = vadd.f32 0.0, %v1393
        %v1395 = vpop.f32.mrb[0].mxu0
        %1396 = vmatprep.mubr.bf16.mxu0 0
        %1397 = vmatmul.mubr.bf16.gmra.mrb[0].mxu0 %v1031
        %v1398 = vpop.f32.mrb[0].mxu0
        %v1399 = vadd.f32 0.0, %v1398
        %v1400 = vpop.f32.mrb[0].mxu0
        %v1401 = vpop.f32.mrb[0].mxu0
        %v1402 = vadd.f32 0.0, %v1401
        %v1403 = vpop.f32.mrb[0].mxu0
        %1404 = vmatprep.mubr.bf16.mxu0 0
        %1405 = vmatmul.mubr.bf16.gmra.mrb[0].mxu0 %v1034
        %v1406 = vpop.f32.mrb[0].mxu0
        %v1407 = vadd.f32 0.0, %v1406
        %v1408 = vpop.f32.mrb[0].mxu0
        %v1409 = vpop.f32.mrb[0].mxu0
        %v1410 = vadd.f32 0.0, %v1409
        %v1411 = vpop.f32.mrb[0].mxu0
        %1412 = vmatprep.mubr.bf16.mxu0 0
        %1413 = vmatmul.mubr.bf16.gmra.mrb[0].mxu0 %v1037
        %v1414 = vpop.f32.mrb[0].mxu0
        %v1415 = vadd.f32 0.0, %v1414
        %v1416 = vpop.f32.mrb[0].mxu0
        %v1417 = vpop.f32.mrb[0].mxu0
        %v1418 = vadd.f32 0.0, %v1417
        %v1419 = vpop.f32.mrb[0].mxu0
        %1420 = vmatprep.mubr.bf16.mxu0 0
        %1421 = vmatmul.mubr.bf16.gmra.mrb[0].mxu0 %v1040
        %v1422 = vpop.f32.mrb[0].mxu0
        %v1423 = vadd.f32 0.0, %v1422
        %v1424 = vpop.f32.mrb[0].mxu0
        %v1425 = vpop.f32.mrb[0].mxu0
        %v1426 = vadd.f32 0.0, %v1425
        %v1427 = vpop.f32.mrb[0].mxu0
        %1428 = vmatprep.mubr.bf16.mxu0 0
        %1429 = vmatmul.mubr.bf16.gmra.mrb[0].mxu0 %v1043
        %v1430 = vpop.f32.mrb[0].mxu0
        %v1431 = vadd.f32 0.0, %v1430
        %v1432 = vpop.f32.mrb[0].mxu0
        %v1433 = vpop.f32.mrb[0].mxu0
        %v1434 = vadd.f32 0.0, %v1433
        %v1435 = vpop.f32.mrb[0].mxu0
        %1436 = vmatprep.mubr.bf16.mxu0 0
        %1437 = vmatmul.mubr.bf16.gmra.mrb[0].mxu0 %v1046
        %v1438 = vpop.f32.mrb[0].mxu0
        %v1439 = vadd.f32 0.0, %v1438
        %v1440 = vpop.f32.mrb[0].mxu0
        %v1441 = vpop.f32.mrb[0].mxu0
        %v1442 = vadd.f32 0.0, %v1441
        %v1443 = vpop.f32.mrb[0].mxu0
        %1444 = vmatprep.mubr.bf16.mxu0 0
        %1445 = vmatmul.mubr.bf16.gmra.mrb[0].mxu0 %v1049
        %v1446 = vpop.f32.mrb[0].mxu0
        %v1447 = vadd.f32 0.0, %v1446
        %v1448 = vpop.f32.mrb[0].mxu0
        %v1449 = vpop.f32.mrb[0].mxu0
        %v1450 = vadd.f32 0.0, %v1449
        %v1451 = vpop.f32.mrb[0].mxu0
        %1452 = vmatprep.mubr.bf16.mxu0 0
        %1453 = vmatmul.mubr.bf16.gmra.mrb[0].mxu0 %v1052
        %v1454 = vpop.f32.mrb[0].mxu0
        %v1455 = vadd.f32 0.0, %v1454
        %v1456 = vpop.f32.mrb[0].mxu0
        %v1457 = vpop.f32.mrb[0].mxu0
        %v1458 = vadd.f32 0.0, %v1457
        %v1459 = vpop.f32.mrb[0].mxu0
        %1460 = vmatprep.mubr.bf16.mxu0 0
        %1461 = vmatmul.mubr.bf16.gmra.mrb[0].mxu0 %v1055
        %v1462 = vpop.f32.mrb[0].mxu0
        %v1463 = vadd.f32 0.0, %v1462
        %v1464 = vpop.f32.mrb[0].mxu0
        %v1465 = vpop.f32.mrb[0].mxu0
        %v1466 = vadd.f32 0.0, %v1465
        %v1467 = vpop.f32.mrb[0].mxu0
        %1468 = vmatprep.mubr.bf16.mxu0 0
        %1469 = vmatmul.mubr.bf16.gmra.mrb[0].mxu0 %v1058
        %v1470 = vpop.f32.mrb[0].mxu0
        %v1471 = vadd.f32 0.0, %v1470
        %v1472 = vpop.f32.mrb[0].mxu0
        %v1473 = vpop.f32.mrb[0].mxu0
        %v1474 = vadd.f32 0.0, %v1473
        %v1475 = vpop.f32.mrb[0].mxu0
        %1476 = vmatprep.mubr.bf16.mxu0 0
        %1477 = vmatmul.mubr.bf16.gmra.mrb[0].mxu0 %v1061
        %v1478 = vpop.f32.mrb[0].mxu0
        %v1479 = vadd.f32 0.0, %v1478
        %v1480 = vpop.f32.mrb[0].mxu0
        %v1481 = vpop.f32.mrb[0].mxu0
        %v1482 = vadd.f32 0.0, %v1481
        %v1483 = vpop.f32.mrb[0].mxu0
        %1484 = vmatprep.mubr.bf16.mxu0 0
        %1485 = vmatmul.mubr.bf16.gmra.mrb[0].mxu0 %v1064
        %v1486 = vpop.f32.mrb[0].mxu0
        %v1487 = vadd.f32 0.0, %v1486
        %v1488 = vpop.f32.mrb[0].mxu0
        %v1489 = vpop.f32.mrb[0].mxu0
        %v1490 = vadd.f32 0.0, %v1489
        %v1491 = vpop.f32.mrb[0].mxu0
        %1492 = vmatprep.mubr.bf16.mxu0 0
        %1493 = vmatmul.mubr.bf16.gmra.mrb[0].mxu0 %v1067
        %v1494 = vpop.f32.mrb[0].mxu0
        %v1495 = vadd.f32 0.0, %v1494
        %v1496 = vpop.f32.mrb[0].mxu0
        %v1497 = vpop.f32.mrb[0].mxu0
        %v1498 = vadd.f32 0.0, %v1497
        %v1499 = vpop.f32.mrb[0].mxu0
        %1500 = vmatprep.mubr.bf16.mxu0 0
        %1501 = vmatmul.mubr.bf16.gmra.mrb[0].mxu0 %v1070
        %v1502 = vpop.f32.mrb[0].mxu0
        %v1503 = vadd.f32 0.0, %v1502
        %v1504 = vpop.f32.mrb[0].mxu0
        %v1505 = vpop.f32.mrb[0].mxu0
        %v1506 = vadd.f32 0.0, %v1505
        %v1507 = vpop.f32.mrb[0].mxu0
        %1508 = vmatprep.mubr.bf16.mxu0 0
        %1509 = vmatmul.mubr.bf16.gmra.mrb[0].mxu0 %v1073
        %v1510 = vpop.f32.mrb[0].mxu0
        %v1511 = vadd.f32 0.0, %v1510
        %v1512 = vpop.f32.mrb[0].mxu0
        %v1513 = vpop.f32.mrb[0].mxu0
        %v1514 = vadd.f32 0.0, %v1513
        %v1515 = vpop.f32.mrb[0].mxu0
        %1516 = vmatprep.mubr.bf16.mxu0 0
        %1517 = vmatmul.mubr.bf16.gmra.mrb[0].mxu0 %v1076
        %v1518 = vpop.f32.mrb[0].mxu0
        %v1519 = vadd.f32 0.0, %v1518
        %v1520 = vpop.f32.mrb[0].mxu0
        %v1521 = vpop.f32.mrb[0].mxu0
        %v1522 = vadd.f32 0.0, %v1521
        %v1523 = vpop.f32.mrb[0].mxu0
        %1524 = vmatprep.mubr.bf16.mxu0 0
        %1525 = vmatmul.mubr.bf16.gmra.mrb[0].mxu0 %v1079
        %v1526 = vpop.f32.mrb[0].mxu0
        %v1527 = vadd.f32 0.0, %v1526
        %v1528 = vpop.f32.mrb[0].mxu0
        %v1529 = vpop.f32.mrb[0].mxu0
        %v1530 = vadd.f32 0.0, %v1529
        %v1531 = vpop.f32.mrb[0].mxu0
        %1532 = vmatprep.mubr.bf16.mxu0 0
        %1533 = vmatmul.mubr.bf16.gmra.mrb[0].mxu0 %v1082
        %v1534 = vpop.f32.mrb[0].mxu0
        %v1535 = vadd.f32 0.0, %v1534
        %v1536 = vpop.f32.mrb[0].mxu0
        %v1537 = vpop.f32.mrb[0].mxu0
        %v1538 = vadd.f32 0.0, %v1537
        %v1539 = vpop.f32.mrb[0].mxu0
        %1540 = vmatprep.mubr.bf16.mxu0 0
        %1541 = vmatmul.mubr.bf16.gmra.mrb[0].mxu0 %v1085
        %v1542 = vpop.f32.mrb[0].mxu0
        %v1543 = vadd.f32 0.0, %v1542
        %v1544 = vpop.f32.mrb[0].mxu0
        %v1545 = vpop.f32.mrb[0].mxu0
        %v1546 = vadd.f32 0.0, %v1545
        %v1547 = vpop.f32.mrb[0].mxu0
        %1548 = vmatprep.mubr.bf16.mxu0 0
        %1549 = vmatmul.mubr.bf16.gmra.mrb[0].mxu0 %v1088
        %v1550 = vpop.f32.mrb[0].mxu0
        %v1551 = vadd.f32 0.0, %v1550
        %v1552 = vpop.f32.mrb[0].mxu0
        %v1553 = vpop.f32.mrb[0].mxu0
        %v1554 = vadd.f32 0.0, %v1553
        %v1555 = vpop.f32.mrb[0].mxu0
        %1556 = vmatprep.mubr.bf16.mxu0 0
        %1557 = vmatmul.mubr.bf16.gmra.mrb[0].mxu0 %v1091
        %v1558 = vpop.f32.mrb[0].mxu0
        %v1559 = vadd.f32 0.0, %v1558
        %v1560 = vpop.f32.mrb[0].mxu0
        %v1561 = vpop.f32.mrb[0].mxu0
        %v1562 = vadd.f32 0.0, %v1561
        %v1563 = vpop.f32.mrb[0].mxu0
        %1564 = vmatprep.mubr.bf16.mxu0 0
        %1565 = vmatmul.mubr.bf16.gmra.mrb[0].mxu0 %v1094
        %v1566 = vpop.f32.mrb[0].mxu0
        %v1567 = vadd.f32 0.0, %v1566
        %v1568 = vpop.f32.mrb[0].mxu0
        %v1569 = vpop.f32.mrb[0].mxu0
        %v1570 = vadd.f32 0.0, %v1569
        %v1571 = vpop.f32.mrb[0].mxu0
        %1572 = vmatprep.mubr.bf16.mxu0 0
        %1573 = vmatmul.mubr.bf16.gmra.mrb[0].mxu0 %v1097
        %v1574 = vpop.f32.mrb[0].mxu0
        %v1575 = vadd.f32 0.0, %v1574
        %v1576 = vpop.f32.mrb[0].mxu0
        %v1577 = vpop.f32.mrb[0].mxu0
        %v1578 = vadd.f32 0.0, %v1577
        %v1579 = vpop.f32.mrb[0].mxu0
        %1580 = vmatprep.mubr.bf16.mxu0 0
        %1581 = vmatmul.mubr.bf16.gmra.mrb[0].mxu0 %v1100
        %v1582 = vpop.f32.mrb[0].mxu0
        %v1583 = vadd.f32 0.0, %v1582
        %v1584 = vpop.f32.mrb[0].mxu0
        %v1585 = vpop.f32.mrb[0].mxu0
        %v1586 = vadd.f32 0.0, %v1585
        %v1587 = vpop.f32.mrb[0].mxu0
        %1588 = vmatprep.mubr.bf16.mxu0 0
        %1589 = vmatmul.mubr.bf16.gmra.mrb[0].mxu0 %v1103
        %v1590 = vpop.f32.mrb[0].mxu0
        %v1591 = vadd.f32 0.0, %v1590
        %v1592 = vpop.f32.mrb[0].mxu0
        %v1593 = vpop.f32.mrb[0].mxu0
        %v1594 = vadd.f32 0.0, %v1593
        %v1595 = vpop.f32.mrb[0].mxu0
        %1596 = vmatprep.mubr.bf16.mxu0 0
        %1597 = vmatmul.mubr.bf16.gmra.mrb[0].mxu0 %v1106
        %v1598 = vpop.f32.mrb[0].mxu0
        %v1599 = vadd.f32 0.0, %v1598
        %v1600 = vpop.f32.mrb[0].mxu0
        %v1601 = vpop.f32.mrb[0].mxu0
        %v1602 = vadd.f32 0.0, %v1601
        %v1603 = vpop.f32.mrb[0].mxu0
        %1604 = vmatprep.mubr.bf16.mxu0 0
        %1605 = vmatmul.mubr.bf16.gmra.mrb[0].mxu0 %v1109
        %v1606 = vpop.f32.mrb[0].mxu0
        %v1607 = vadd.f32 0.0, %v1606
        %v1608 = vpop.f32.mrb[0].mxu0
        %v1609 = vpop.f32.mrb[0].mxu0
        %v1610 = vadd.f32 0.0, %v1609
        %v1611 = vpop.f32.mrb[0].mxu0
        %1612 = vmatprep.mubr.bf16.mxu0 0
        %1613 = vmatmul.mubr.bf16.gmra.mrb[0].mxu0 %v1112
        %v1614 = vpop.f32.mrb[0].mxu0
        %v1615 = vadd.f32 0.0, %v1614
        %v1616 = vpop.f32.mrb[0].mxu0
        %v1617 = vpop.f32.mrb[0].mxu0
        %v1618 = vadd.f32 0.0, %v1617
        %v1619 = vpop.f32.mrb[0].mxu0
        %1620 = vmatprep.mubr.bf16.mxu0 0
        %1621 = vmatmul.mubr.bf16.gmra.mrb[0].mxu0 %v1115
        %v1622 = vpop.f32.mrb[0].mxu0
        %v1623 = vadd.f32 0.0, %v1622
        %v1624 = vpop.f32.mrb[0].mxu0
        %v1625 = vpop.f32.mrb[0].mxu0
        %v1626 = vadd.f32 0.0, %v1625
        %v1627 = vpop.f32.mrb[0].mxu0
        %1628 = vmatprep.mubr.bf16.mxu0 0
        %1629 = vmatmul.mubr.bf16.gmra.mrb[0].mxu0 %v1118
        %v1630 = vpop.f32.mrb[0].mxu0
        %v1631 = vadd.f32 0.0, %v1630
        %v1632 = vpop.f32.mrb[0].mxu0
        %v1633 = vpop.f32.mrb[0].mxu0
        %v1634 = vadd.f32 0.0, %v1633
        %v1635 = vpop.f32.mrb[0].mxu0
        %1636 = vmatprep.mubr.bf16.mxu0 0
        %1637 = vmatmul.mubr.bf16.gmra.mrb[0].mxu0 %v1121
        %v1638 = vpop.f32.mrb[0].mxu0
        %v1639 = vadd.f32 0.0, %v1638
        %v1640 = vpop.f32.mrb[0].mxu0
        %v1641 = vpop.f32.mrb[0].mxu0
        %v1642 = vadd.f32 0.0, %v1641
        %v1643 = vpop.f32.mrb[0].mxu0
        %1644 = vmatprep.mubr.bf16.mxu0 0
        %1645 = vmatmul.mubr.bf16.gmra.mrb[0].mxu0 %v1124
        %v1646 = vpop.f32.mrb[0].mxu0
        %v1647 = vadd.f32 0.0, %v1646
        %v1648 = vpop.f32.mrb[0].mxu0
        %v1649 = vpop.f32.mrb[0].mxu0
        %v1650 = vadd.f32 0.0, %v1649
        %v1651 = vpop.f32.mrb[0].mxu0
        %1652 = vmatprep.mubr.bf16.mxu0 0
        %1653 = vmatmul.mubr.bf16.gmra.mrb[0].mxu0 %v1127
        %v1654 = vpop.f32.mrb[0].mxu0
        %v1655 = vadd.f32 0.0, %v1654
        %v1656 = vpop.f32.mrb[0].mxu0
        %v1657 = vpop.f32.mrb[0].mxu0
        %v1658 = vadd.f32 0.0, %v1657
        %v1659 = vpop.f32.mrb[0].mxu0
        %1660 = vmatprep.mubr.bf16.mxu0 0
        %1661 = vmatmul.mubr.bf16.gmra.mrb[0].mxu0 %v1130
        %v1662 = vpop.f32.mrb[0].mxu0
        %v1663 = vadd.f32 0.0, %v1662
        %v1664 = vpop.f32.mrb[0].mxu0
        %v1665 = vpop.f32.mrb[0].mxu0
        %v1666 = vadd.f32 0.0, %v1665
        %v1667 = vpop.f32.mrb[0].mxu0
        %1668 = vmatprep.mubr.bf16.mxu0 0
        %1669 = vmatmul.mubr.bf16.gmra.mrb[0].mxu0 %v1133
        %v1670 = vpop.f32.mrb[0].mxu0
        %v1671 = vadd.f32 0.0, %v1670
        %v1672 = vpop.f32.mrb[0].mxu0
        %v1673 = vpop.f32.mrb[0].mxu0
        %v1674 = vadd.f32 0.0, %v1673
        %v1675 = vpop.f32.mrb[0].mxu0
        %1676 = vmatprep.mubr.bf16.mxu0 0
        %1677 = vmatmul.mubr.bf16.gmra.mrb[0].mxu0 %v1136
        %v1678 = vpop.f32.mrb[0].mxu0
        %v1679 = vadd.f32 0.0, %v1678
        %v1680 = vpop.f32.mrb[0].mxu0
        %v1681 = vpop.f32.mrb[0].mxu0
        %v1682 = vadd.f32 0.0, %v1681
        %v1683 = vpop.f32.mrb[0].mxu0
        %1684 = vmatprep.mubr.bf16.mxu0 0
        %1685 = vmatmul.mubr.bf16.gmra.mrb[0].mxu0 %v1139
        %v1686 = vpop.f32.mrb[0].mxu0
        %v1687 = vadd.f32 0.0, %v1686
        %v1688 = vpop.f32.mrb[0].mxu0
        %v1689 = vpop.f32.mrb[0].mxu0
        %v1690 = vadd.f32 0.0, %v1689
        %v1691 = vpop.f32.mrb[0].mxu0
        %1692 = vdwg.mxu0
        %v1693 = vadd.f32 %v357, %v1183
        %v1694 = vadd.f32 %v358, %v1186
        %v1695 = vadd.f32 %v359, %v1191
        %v1696 = vadd.f32 %v360, %v1194
        %v1697 = vadd.f32 %v361, %v1199
        %v1698 = vadd.f32 %v362, %v1202
        %v1699 = vadd.f32 %v363, %v1207
        %v1700 = vadd.f32 %v364, %v1210
        %v1701 = vadd.f32 %v365, %v1215
        %v1702 = vadd.f32 %v366, %v1218
        %v1703 = vadd.f32 %v367, %v1223
        %v1704 = vadd.f32 %v368, %v1226
        %v1705 = vadd.f32 %v369, %v1231
        %v1706 = vadd.f32 %v370, %v1234
        %v1707 = vadd.f32 %v371, %v1239
        %v1708 = vadd.f32 %v372, %v1242
        %v1709 = vadd.f32 %v373, %v1247
        %v1710 = vadd.f32 %v374, %v1250
        %v1711 = vadd.f32 %v375, %v1255
        %v1712 = vadd.f32 %v376, %v1258
        %v1713 = vadd.f32 %v377, %v1263
        %v1714 = vadd.f32 %v378, %v1266
        %v1715 = vadd.f32 %v379, %v1271
        %v1716 = vadd.f32 %v380, %v1274
        %v1717 = vadd.f32 %v381, %v1279
        %v1718 = vadd.f32 %v382, %v1282
        %v1719 = vadd.f32 %v383, %v1287
        %v1720 = vadd.f32 %v384, %v1290
        %v1721 = vadd.f32 %v385, %v1295
        %v1722 = vadd.f32 %v386, %v1298
        %v1723 = vadd.f32 %v387, %v1303
        %v1724 = vadd.f32 %v388, %v1306
        %v1725 = vadd.f32 %v389, %v1311
        %v1726 = vadd.f32 %v390, %v1314
        %v1727 = vadd.f32 %v391, %v1319
        %v1728 = vadd.f32 %v392, %v1322
        %v1729 = vadd.f32 %v393, %v1327
        %v1730 = vadd.f32 %v394, %v1330
        %v1731 = vadd.f32 %v395, %v1335
        %v1732 = vadd.f32 %v396, %v1338
        %v1733 = vadd.f32 %v397, %v1343
        %v1734 = vadd.f32 %v398, %v1346
        %v1735 = vadd.f32 %v399, %v1351
        %v1736 = vadd.f32 %v400, %v1354
        %v1737 = vadd.f32 %v401, %v1359
        %v1738 = vadd.f32 %v402, %v1362
        %v1739 = vadd.f32 %v403, %v1367
        %v1740 = vadd.f32 %v404, %v1370
        %v1741 = vadd.f32 %v405, %v1375
        %v1742 = vadd.f32 %v406, %v1378
        %v1743 = vadd.f32 %v407, %v1383
        %v1744 = vadd.f32 %v408, %v1386
        %v1745 = vadd.f32 %v409, %v1391
        %v1746 = vadd.f32 %v410, %v1394
        %v1747 = vadd.f32 %v411, %v1399
        %v1748 = vadd.f32 %v412, %v1402
        %v1749 = vadd.f32 %v413, %v1407
        %v1750 = vadd.f32 %v414, %v1410
        %v1751 = vadd.f32 %v415, %v1415
        %v1752 = vadd.f32 %v416, %v1418
        %v1753 = vadd.f32 %v417, %v1423
        %v1754 = vadd.f32 %v418, %v1426
        %v1755 = vadd.f32 %v419, %v1431
        %v1756 = vadd.f32 %v420, %v1434
        %v1757 = vadd.f32 %v421, %v1439
        %v1758 = vadd.f32 %v422, %v1442
        %v1759 = vadd.f32 %v423, %v1447
        %v1760 = vadd.f32 %v424, %v1450
        %v1761 = vadd.f32 %v425, %v1455
        %v1762 = vadd.f32 %v426, %v1458
        %v1763 = vadd.f32 %v427, %v1463
        %v1764 = vadd.f32 %v428, %v1466
        %v1765 = vadd.f32 %v429, %v1471
        %v1766 = vadd.f32 %v430, %v1474
        %v1767 = vadd.f32 %v431, %v1479
        %v1768 = vadd.f32 %v432, %v1482
        %v1769 = vadd.f32 %v433, %v1487
        %v1770 = vadd.f32 %v434, %v1490
        %v1771 = vadd.f32 %v435, %v1495
        %v1772 = vadd.f32 %v436, %v1498
        %v1773 = vadd.f32 %v437, %v1503
        %v1774 = vadd.f32 %v438, %v1506
        %v1775 = vadd.f32 %v439, %v1511
        %v1776 = vadd.f32 %v440, %v1514
        %v1777 = vadd.f32 %v441, %v1519
        %v1778 = vadd.f32 %v442, %v1522
        %v1779 = vadd.f32 %v443, %v1527
        %v1780 = vadd.f32 %v444, %v1530
        %v1781 = vadd.f32 %v445, %v1535
        %v1782 = vadd.f32 %v446, %v1538
        %v1783 = vadd.f32 %v447, %v1543
        %v1784 = vadd.f32 %v448, %v1546
        %v1785 = vadd.f32 %v449, %v1551
        %v1786 = vadd.f32 %v450, %v1554
        %v1787 = vadd.f32 %v451, %v1559
        %v1788 = vadd.f32 %v452, %v1562
        %v1789 = vadd.f32 %v453, %v1567
        %v1790 = vadd.f32 %v454, %v1570
        %v1791 = vadd.f32 %v455, %v1575
        %v1792 = vadd.f32 %v456, %v1578
        %v1793 = vadd.f32 %v457, %v1583
        %v1794 = vadd.f32 %v458, %v1586
        %v1795 = vadd.f32 %v459, %v1591
        %v1796 = vadd.f32 %v460, %v1594
        %v1797 = vadd.f32 %v461, %v1599
        %v1798 = vadd.f32 %v462, %v1602
        %v1799 = vadd.f32 %v463, %v1607
        %v1800 = vadd.f32 %v464, %v1610
        %v1801 = vadd.f32 %v465, %v1615
        %v1802 = vadd.f32 %v466, %v1618
        %v1803 = vadd.f32 %v467, %v1623
        %v1804 = vadd.f32 %v468, %v1626
        %v1805 = vadd.f32 %v469, %v1631
        %v1806 = vadd.f32 %v470, %v1634
        %v1807 = vadd.f32 %v471, %v1639
        %v1808 = vadd.f32 %v472, %v1642
        %v1809 = vadd.f32 %v473, %v1647
        %v1810 = vadd.f32 %v474, %v1650
        %v1811 = vadd.f32 %v475, %v1655
        %v1812 = vadd.f32 %v476, %v1658
        %v1813 = vadd.f32 %v477, %v1663
        %v1814 = vadd.f32 %v478, %v1666
        %v1815 = vadd.f32 %v479, %v1671
        %v1816 = vadd.f32 %v480, %v1674
        %v1817 = vadd.f32 %v481, %v1679
        %v1818 = vadd.f32 %v482, %v1682
        %v1819 = vadd.f32 %v483, %v1687
        %v1820 = vadd.f32 %v484, %v1690
        %1821 = vst [vmem:[#allocation2] sm:$0xff] %v1693
        %1822 = vst [vmem:[#allocation2 + $0x8] sm:$0xff] %v1694
        %1823 = vst [vmem:[#allocation2 + $0x10] sm:$0xff] %v1695
        %1824 = vst [vmem:[#allocation2 + $0x18] sm:$0xff] %v1696
        %1825 = vst [vmem:[#allocation2 + $0x20] sm:$0xff] %v1697
        %1826 = vst [vmem:[#allocation2 + $0x28] sm:$0xff] %v1698
        %1827 = vst [vmem:[#allocation2 + $0x30] sm:$0xff] %v1699
        %1828 = vst [vmem:[#allocation2 + $0x38] sm:$0xff] %v1700
        %1829 = vst [vmem:[#allocation2 + $0x40] sm:$0xff] %v1701
        %1830 = vst [vmem:[#allocation2 + $0x48] sm:$0xff] %v1702
        %1831 = vst [vmem:[#allocation2 + $0x50] sm:$0xff] %v1703
        %1832 = vst [vmem:[#allocation2 + $0x58] sm:$0xff] %v1704
        %1833 = vst [vmem:[#allocation2 + $0x60] sm:$0xff] %v1705
        %1834 = vst [vmem:[#allocation2 + $0x68] sm:$0xff] %v1706
        %1835 = vst [vmem:[#allocation2 + $0x70] sm:$0xff] %v1707
        %1836 = vst [vmem:[#allocation2 + $0x78] sm:$0xff] %v1708
        %1837 = vst [vmem:[#allocation2 + $0x80] sm:$0xff] %v1709
        %1838 = vst [vmem:[#allocation2 + $0x88] sm:$0xff] %v1710
        %1839 = vst [vmem:[#allocation2 + $0x90] sm:$0xff] %v1711
        %1840 = vst [vmem:[#allocation2 + $0x98] sm:$0xff] %v1712
        %1841 = vst [vmem:[#allocation2 + $0xa0] sm:$0xff] %v1713
        %1842 = vst [vmem:[#allocation2 + $0xa8] sm:$0xff] %v1714
        %1843 = vst [vmem:[#allocation2 + $0xb0] sm:$0xff] %v1715
        %1844 = vst [vmem:[#allocation2 + $0xb8] sm:$0xff] %v1716
        %1845 = vst [vmem:[#allocation2 + $0xc0] sm:$0xff] %v1717
        %1846 = vst [vmem:[#allocation2 + $0xc8] sm:$0xff] %v1718
        %1847 = vst [vmem:[#allocation2 + $0xd0] sm:$0xff] %v1719
        %1848 = vst [vmem:[#allocation2 + $0xd8] sm:$0xff] %v1720
        %1849 = vst [vmem:[#allocation2 + $0xe0] sm:$0xff] %v1721
        %1850 = vst [vmem:[#allocation2 + $0xe8] sm:$0xff] %v1722
        %1851 = vst [vmem:[#allocation2 + $0xf0] sm:$0xff] %v1723
        %1852 = vst [vmem:[#allocation2 + $0xf8] sm:$0xff] %v1724
        %1853 = vst [vmem:[#allocation2 + $0x100] sm:$0xff] %v1725
        %1854 = vst [vmem:[#allocation2 + $0x108] sm:$0xff] %v1726
        %1855 = vst [vmem:[#allocation2 + $0x110] sm:$0xff] %v1727
        %1856 = vst [vmem:[#allocation2 + $0x118] sm:$0xff] %v1728
        %1857 = vst [vmem:[#allocation2 + $0x120] sm:$0xff] %v1729
        %1858 = vst [vmem:[#allocation2 + $0x128] sm:$0xff] %v1730
        %1859 = vst [vmem:[#allocation2 + $0x130] sm:$0xff] %v1731
        %1860 = vst [vmem:[#allocation2 + $0x138] sm:$0xff] %v1732
        %1861 = vst [vmem:[#allocation2 + $0x140] sm:$0xff] %v1733
        %1862 = vst [vmem:[#allocation2 + $0x148] sm:$0xff] %v1734
        %1863 = vst [vmem:[#allocation2 + $0x150] sm:$0xff] %v1735
        %1864 = vst [vmem:[#allocation2 + $0x158] sm:$0xff] %v1736
        %1865 = vst [vmem:[#allocation2 + $0x160] sm:$0xff] %v1737
        %1866 = vst [vmem:[#allocation2 + $0x168] sm:$0xff] %v1738
        %1867 = vst [vmem:[#allocation2 + $0x170] sm:$0xff] %v1739
        %1868 = vst [vmem:[#allocation2 + $0x178] sm:$0xff] %v1740
        %1869 = vst [vmem:[#allocation2 + $0x180] sm:$0xff] %v1741
        %1870 = vst [vmem:[#allocation2 + $0x188] sm:$0xff] %v1742
        %1871 = vst [vmem:[#allocation2 + $0x190] sm:$0xff] %v1743
        %1872 = vst [vmem:[#allocation2 + $0x198] sm:$0xff] %v1744
        %1873 = vst [vmem:[#allocation2 + $0x1a0] sm:$0xff] %v1745
        %1874 = vst [vmem:[#allocation2 + $0x1a8] sm:$0xff] %v1746
        %1875 = vst [vmem:[#allocation2 + $0x1b0] sm:$0xff] %v1747
        %1876 = vst [vmem:[#allocation2 + $0x1b8] sm:$0xff] %v1748
        %1877 = vst [vmem:[#allocation2 + $0x1c0] sm:$0xff] %v1749
        %1878 = vst [vmem:[#allocation2 + $0x1c8] sm:$0xff] %v1750
        %1879 = vst [vmem:[#allocation2 + $0x1d0] sm:$0xff] %v1751
        %1880 = vst [vmem:[#allocation2 + $0x1d8] sm:$0xff] %v1752
        %1881 = vst [vmem:[#allocation2 + $0x1e0] sm:$0xff] %v1753
        %1882 = vst [vmem:[#allocation2 + $0x1e8] sm:$0xff] %v1754
        %1883 = vst [vmem:[#allocation2 + $0x1f0] sm:$0xff] %v1755
        %1884 = vst [vmem:[#allocation2 + $0x1f8] sm:$0xff] %v1756
        %1885 = vst [vmem:[#allocation2 + $0x200] sm:$0xff] %v1757
        %1886 = vst [vmem:[#allocation2 + $0x208] sm:$0xff] %v1758
        %1887 = vst [vmem:[#allocation2 + $0x210] sm:$0xff] %v1759
        %1888 = vst [vmem:[#allocation2 + $0x218] sm:$0xff] %v1760
        %1889 = vst [vmem:[#allocation2 + $0x220] sm:$0xff] %v1761
        %1890 = vst [vmem:[#allocation2 + $0x228] sm:$0xff] %v1762
        %1891 = vst [vmem:[#allocation2 + $0x230] sm:$0xff] %v1763
        %1892 = vst [vmem:[#allocation2 + $0x238] sm:$0xff] %v1764
        %1893 = vst [vmem:[#allocation2 + $0x240] sm:$0xff] %v1765
        %1894 = vst [vmem:[#allocation2 + $0x248] sm:$0xff] %v1766
        %1895 = vst [vmem:[#allocation2 + $0x250] sm:$0xff] %v1767
        %1896 = vst [vmem:[#allocation2 + $0x258] sm:$0xff] %v1768
        %1897 = vst [vmem:[#allocation2 + $0x260] sm:$0xff] %v1769
        %1898 = vst [vmem:[#allocation2 + $0x268] sm:$0xff] %v1770
        %1899 = vst [vmem:[#allocation2 + $0x270] sm:$0xff] %v1771
        %1900 = vst [vmem:[#allocation2 + $0x278] sm:$0xff] %v1772
        %1901 = vst [vmem:[#allocation2 + $0x280] sm:$0xff] %v1773
        %1902 = vst [vmem:[#allocation2 + $0x288] sm:$0xff] %v1774
        %1903 = vst [vmem:[#allocation2 + $0x290] sm:$0xff] %v1775
        %1904 = vst [vmem:[#allocation2 + $0x298] sm:$0xff] %v1776
        %1905 = vst [vmem:[#allocation2 + $0x2a0] sm:$0xff] %v1777
        %1906 = vst [vmem:[#allocation2 + $0x2a8] sm:$0xff] %v1778
        %1907 = vst [vmem:[#allocation2 + $0x2b0] sm:$0xff] %v1779
        %1908 = vst [vmem:[#allocation2 + $0x2b8] sm:$0xff] %v1780
        %1909 = vst [vmem:[#allocation2 + $0x2c0] sm:$0xff] %v1781
        %1910 = vst [vmem:[#allocation2 + $0x2c8] sm:$0xff] %v1782
        %1911 = vst [vmem:[#allocation2 + $0x2d0] sm:$0xff] %v1783
        %1912 = vst [vmem:[#allocation2 + $0x2d8] sm:$0xff] %v1784
        %1913 = vst [vmem:[#allocation2 + $0x2e0] sm:$0xff] %v1785
        %1914 = vst [vmem:[#allocation2 + $0x2e8] sm:$0xff] %v1786
        %1915 = vst [vmem:[#allocation2 + $0x2f0] sm:$0xff] %v1787
        %1916 = vst [vmem:[#allocation2 + $0x2f8] sm:$0xff] %v1788
        %1917 = vst [vmem:[#allocation2 + $0x300] sm:$0xff] %v1789
        %1918 = vst [vmem:[#allocation2 + $0x308] sm:$0xff] %v1790
        %1919 = vst [vmem:[#allocation2 + $0x310] sm:$0xff] %v1791
        %1920 = vst [vmem:[#allocation2 + $0x318] sm:$0xff] %v1792
        %1921 = vst [vmem:[#allocation2 + $0x320] sm:$0xff] %v1793
        %1922 = vst [vmem:[#allocation2 + $0x328] sm:$0xff] %v1794
        %1923 = vst [vmem:[#allocation2 + $0x330] sm:$0xff] %v1795
        %1924 = vst [vmem:[#allocation2 + $0x338] sm:$0xff] %v1796
        %1925 = vst [vmem:[#allocation2 + $0x340] sm:$0xff] %v1797
        %1926 = vst [vmem:[#allocation2 + $0x348] sm:$0xff] %v1798
        %1927 = vst [vmem:[#allocation2 + $0x350] sm:$0xff] %v1799
        %1928 = vst [vmem:[#allocation2 + $0x358] sm:$0xff] %v1800
        %1929 = vst [vmem:[#allocation2 + $0x360] sm:$0xff] %v1801
        %1930 = vst [vmem:[#allocation2 + $0x368] sm:$0xff] %v1802
        %1931 = vst [vmem:[#allocation2 + $0x370] sm:$0xff] %v1803
        %1932 = vst [vmem:[#allocation2 + $0x378] sm:$0xff] %v1804
        %1933 = vst [vmem:[#allocation2 + $0x380] sm:$0xff] %v1805
        %1934 = vst [vmem:[#allocation2 + $0x388] sm:$0xff] %v1806
        %1935 = vst [vmem:[#allocation2 + $0x390] sm:$0xff] %v1807
        %1936 = vst [vmem:[#allocation2 + $0x398] sm:$0xff] %v1808
        %1937 = vst [vmem:[#allocation2 + $0x3a0] sm:$0xff] %v1809
        %1938 = vst [vmem:[#allocation2 + $0x3a8] sm:$0xff] %v1810
        %1939 = vst [vmem:[#allocation2 + $0x3b0] sm:$0xff] %v1811
        %1940 = vst [vmem:[#allocation2 + $0x3b8] sm:$0xff] %v1812
        %1941 = vst [vmem:[#allocation2 + $0x3c0] sm:$0xff] %v1813
        %1942 = vst [vmem:[#allocation2 + $0x3c8] sm:$0xff] %v1814
        %1943 = vst [vmem:[#allocation2 + $0x3d0] sm:$0xff] %v1815
        %1944 = vst [vmem:[#allocation2 + $0x3d8] sm:$0xff] %v1816
        %1945 = vst [vmem:[#allocation2 + $0x3e0] sm:$0xff] %v1817
        %1946 = vst [vmem:[#allocation2 + $0x3e8] sm:$0xff] %v1818
        %1947 = vst [vmem:[#allocation2 + $0x3f0] sm:$0xff] %v1819
        %1948 = vst [vmem:[#allocation2 + $0x3f8] sm:$0xff] %v1820
        // Predicated region
        $region37: #{tpu_custom_call.1} parent=31 // pred_check
          %p1949 = pneg %p218
        $region38: #{tpu_custom_call.1} parent=31 // pred_check_branch
          %1951 = sbr.rel (%p1949) target = $region40
        $region39: #{tpu_custom_call.1} parent=31 // pred_region
          %v1952 = vld [vmem:[#allocation2] sm:$0xff]
          %v1953 = vld [vmem:[#allocation2 + $0x8] sm:$0xff]
          %v1954 = vld [vmem:[#allocation2 + $0x10] sm:$0xff]
          %v1955 = vld [vmem:[#allocation2 + $0x18] sm:$0xff]
          %v1956 = vld [vmem:[#allocation2 + $0x20] sm:$0xff]
          %v1957 = vld [vmem:[#allocation2 + $0x28] sm:$0xff]
          %v1958 = vld [vmem:[#allocation2 + $0x30] sm:$0xff]
          %v1959 = vld [vmem:[#allocation2 + $0x38] sm:$0xff]
          %v1960 = vld [vmem:[#allocation2 + $0x40] sm:$0xff]
          %v1961 = vld [vmem:[#allocation2 + $0x48] sm:$0xff]
          %v1962 = vld [vmem:[#allocation2 + $0x50] sm:$0xff]
          %v1963 = vld [vmem:[#allocation2 + $0x58] sm:$0xff]
          %v1964 = vld [vmem:[#allocation2 + $0x60] sm:$0xff]
          %v1965 = vld [vmem:[#allocation2 + $0x68] sm:$0xff]
          %v1966 = vld [vmem:[#allocation2 + $0x70] sm:$0xff]
          %v1967 = vld [vmem:[#allocation2 + $0x78] sm:$0xff]
          %v1968 = vld [vmem:[#allocation2 + $0x80] sm:$0xff]
          %v1969 = vld [vmem:[#allocation2 + $0x88] sm:$0xff]
          %v1970 = vld [vmem:[#allocation2 + $0x90] sm:$0xff]
          %v1971 = vld [vmem:[#allocation2 + $0x98] sm:$0xff]
          %v1972 = vld [vmem:[#allocation2 + $0xa0] sm:$0xff]
          %v1973 = vld [vmem:[#allocation2 + $0xa8] sm:$0xff]
          %v1974 = vld [vmem:[#allocation2 + $0xb0] sm:$0xff]
          %v1975 = vld [vmem:[#allocation2 + $0xb8] sm:$0xff]
          %v1976 = vld [vmem:[#allocation2 + $0xc0] sm:$0xff]
          %v1977 = vld [vmem:[#allocation2 + $0xc8] sm:$0xff]
          %v1978 = vld [vmem:[#allocation2 + $0xd0] sm:$0xff]
          %v1979 = vld [vmem:[#allocation2 + $0xd8] sm:$0xff]
          %v1980 = vld [vmem:[#allocation2 + $0xe0] sm:$0xff]
          %v1981 = vld [vmem:[#allocation2 + $0xe8] sm:$0xff]
          %v1982 = vld [vmem:[#allocation2 + $0xf0] sm:$0xff]
          %v1983 = vld [vmem:[#allocation2 + $0xf8] sm:$0xff]
          %v1984 = vld [vmem:[#allocation2 + $0x100] sm:$0xff]
          %v1985 = vld [vmem:[#allocation2 + $0x108] sm:$0xff]
          %v1986 = vld [vmem:[#allocation2 + $0x110] sm:$0xff]
          %v1987 = vld [vmem:[#allocation2 + $0x118] sm:$0xff]
          %v1988 = vld [vmem:[#allocation2 + $0x120] sm:$0xff]
          %v1989 = vld [vmem:[#allocation2 + $0x128] sm:$0xff]
          %v1990 = vld [vmem:[#allocation2 + $0x130] sm:$0xff]
          %v1991 = vld [vmem:[#allocation2 + $0x138] sm:$0xff]
          %v1992 = vld [vmem:[#allocation2 + $0x140] sm:$0xff]
          %v1993 = vld [vmem:[#allocation2 + $0x148] sm:$0xff]
          %v1994 = vld [vmem:[#allocation2 + $0x150] sm:$0xff]
          %v1995 = vld [vmem:[#allocation2 + $0x158] sm:$0xff]
          %v1996 = vld [vmem:[#allocation2 + $0x160] sm:$0xff]
          %v1997 = vld [vmem:[#allocation2 + $0x168] sm:$0xff]
          %v1998 = vld [vmem:[#allocation2 + $0x170] sm:$0xff]
          %v1999 = vld [vmem:[#allocation2 + $0x178] sm:$0xff]
          %v2000 = vld [vmem:[#allocation2 + $0x180] sm:$0xff]
          %v2001 = vld [vmem:[#allocation2 + $0x188] sm:$0xff]
          %v2002 = vld [vmem:[#allocation2 + $0x190] sm:$0xff]
          %v2003 = vld [vmem:[#allocation2 + $0x198] sm:$0xff]
          %v2004 = vld [vmem:[#allocation2 + $0x1a0] sm:$0xff]
          %v2005 = vld [vmem:[#allocation2 + $0x1a8] sm:$0xff]
          %v2006 = vld [vmem:[#allocation2 + $0x1b0] sm:$0xff]
          %v2007 = vld [vmem:[#allocation2 + $0x1b8] sm:$0xff]
          %v2008 = vld [vmem:[#allocation2 + $0x1c0] sm:$0xff]
          %v2009 = vld [vmem:[#allocation2 + $0x1c8] sm:$0xff]
          %v2010 = vld [vmem:[#allocation2 + $0x1d0] sm:$0xff]
          %v2011 = vld [vmem:[#allocation2 + $0x1d8] sm:$0xff]
          %v2012 = vld [vmem:[#allocation2 + $0x1e0] sm:$0xff]
          %v2013 = vld [vmem:[#allocation2 + $0x1e8] sm:$0xff]
          %v2014 = vld [vmem:[#allocation2 + $0x1f0] sm:$0xff]
          %v2015 = vld [vmem:[#allocation2 + $0x1f8] sm:$0xff]
          %v2016 = vld [vmem:[#allocation2 + $0x200] sm:$0xff]
          %v2017 = vld [vmem:[#allocation2 + $0x208] sm:$0xff]
          %v2018 = vld [vmem:[#allocation2 + $0x210] sm:$0xff]
          %v2019 = vld [vmem:[#allocation2 + $0x218] sm:$0xff]
          %v2020 = vld [vmem:[#allocation2 + $0x220] sm:$0xff]
          %v2021 = vld [vmem:[#allocation2 + $0x228] sm:$0xff]
          %v2022 = vld [vmem:[#allocation2 + $0x230] sm:$0xff]
          %v2023 = vld [vmem:[#allocation2 + $0x238] sm:$0xff]
          %v2024 = vld [vmem:[#allocation2 + $0x240] sm:$0xff]
          %v2025 = vld [vmem:[#allocation2 + $0x248] sm:$0xff]
          %v2026 = vld [vmem:[#allocation2 + $0x250] sm:$0xff]
          %v2027 = vld [vmem:[#allocation2 + $0x258] sm:$0xff]
          %v2028 = vld [vmem:[#allocation2 + $0x260] sm:$0xff]
          %v2029 = vld [vmem:[#allocation2 + $0x268] sm:$0xff]
          %v2030 = vld [vmem:[#allocation2 + $0x270] sm:$0xff]
          %v2031 = vld [vmem:[#allocation2 + $0x278] sm:$0xff]
          %v2032 = vld [vmem:[#allocation2 + $0x280] sm:$0xff]
          %v2033 = vld [vmem:[#allocation2 + $0x288] sm:$0xff]
          %v2034 = vld [vmem:[#allocation2 + $0x290] sm:$0xff]
          %v2035 = vld [vmem:[#allocation2 + $0x298] sm:$0xff]
          %v2036 = vld [vmem:[#allocation2 + $0x2a0] sm:$0xff]
          %v2037 = vld [vmem:[#allocation2 + $0x2a8] sm:$0xff]
          %v2038 = vld [vmem:[#allocation2 + $0x2b0] sm:$0xff]
          %v2039 = vld [vmem:[#allocation2 + $0x2b8] sm:$0xff]
          %v2040 = vld [vmem:[#allocation2 + $0x2c0] sm:$0xff]
          %v2041 = vld [vmem:[#allocation2 + $0x2c8] sm:$0xff]
          %v2042 = vld [vmem:[#allocation2 + $0x2d0] sm:$0xff]
          %v2043 = vld [vmem:[#allocation2 + $0x2d8] sm:$0xff]
          %v2044 = vld [vmem:[#allocation2 + $0x2e0] sm:$0xff]
          %v2045 = vld [vmem:[#allocation2 + $0x2e8] sm:$0xff]
          %v2046 = vld [vmem:[#allocation2 + $0x2f0] sm:$0xff]
          %v2047 = vld [vmem:[#allocation2 + $0x2f8] sm:$0xff]
          %v2048 = vld [vmem:[#allocation2 + $0x300] sm:$0xff]
          %v2049 = vld [vmem:[#allocation2 + $0x308] sm:$0xff]
          %v2050 = vld [vmem:[#allocation2 + $0x310] sm:$0xff]
          %v2051 = vld [vmem:[#allocation2 + $0x318] sm:$0xff]
          %v2052 = vld [vmem:[#allocation2 + $0x320] sm:$0xff]
          %v2053 = vld [vmem:[#allocation2 + $0x328] sm:$0xff]
          %v2054 = vld [vmem:[#allocation2 + $0x330] sm:$0xff]
          %v2055 = vld [vmem:[#allocation2 + $0x338] sm:$0xff]
          %v2056 = vld [vmem:[#allocation2 + $0x340] sm:$0xff]
          %v2057 = vld [vmem:[#allocation2 + $0x348] sm:$0xff]
          %v2058 = vld [vmem:[#allocation2 + $0x350] sm:$0xff]
          %v2059 = vld [vmem:[#allocation2 + $0x358] sm:$0xff]
          %v2060 = vld [vmem:[#allocation2 + $0x360] sm:$0xff]
          %v2061 = vld [vmem:[#allocation2 + $0x368] sm:$0xff]
          %v2062 = vld [vmem:[#allocation2 + $0x370] sm:$0xff]
          %v2063 = vld [vmem:[#allocation2 + $0x378] sm:$0xff]
          %v2064 = vld [vmem:[#allocation2 + $0x380] sm:$0xff]
          %v2065 = vld [vmem:[#allocation2 + $0x388] sm:$0xff]
          %v2066 = vld [vmem:[#allocation2 + $0x390] sm:$0xff]
          %v2067 = vld [vmem:[#allocation2 + $0x398] sm:$0xff]
          %v2068 = vld [vmem:[#allocation2 + $0x3a0] sm:$0xff]
          %v2069 = vld [vmem:[#allocation2 + $0x3a8] sm:$0xff]
          %v2070 = vld [vmem:[#allocation2 + $0x3b0] sm:$0xff]
          %v2071 = vld [vmem:[#allocation2 + $0x3b8] sm:$0xff]
          %v2072 = vld [vmem:[#allocation2 + $0x3c0] sm:$0xff]
          %v2073 = vld [vmem:[#allocation2 + $0x3c8] sm:$0xff]
          %v2074 = vld [vmem:[#allocation2 + $0x3d0] sm:$0xff]
          %v2075 = vld [vmem:[#allocation2 + $0x3d8] sm:$0xff]
          %v2076 = vld [vmem:[#allocation2 + $0x3e0] sm:$0xff]
          %v2077 = vld [vmem:[#allocation2 + $0x3e8] sm:$0xff]
          %v2078 = vld [vmem:[#allocation2 + $0x3f0] sm:$0xff]
          %v2079 = vld [vmem:[#allocation2 + $0x3f8] sm:$0xff]
          %v2080 = vpack.c.bf16 %v1953, %v1952
          %v2081 = vpack.c.bf16 %v1955, %v1954
          %v2082 = vpack.c.bf16 %v1957, %v1956
          %v2083 = vpack.c.bf16 %v1959, %v1958
          %v2084 = vpack.c.bf16 %v1961, %v1960
          %v2085 = vpack.c.bf16 %v1963, %v1962
          %v2086 = vpack.c.bf16 %v1965, %v1964
          %v2087 = vpack.c.bf16 %v1967, %v1966
          %v2088 = vpack.c.bf16 %v1969, %v1968
          %v2089 = vpack.c.bf16 %v1971, %v1970
          %v2090 = vpack.c.bf16 %v1973, %v1972
          %v2091 = vpack.c.bf16 %v1975, %v1974
          %v2092 = vpack.c.bf16 %v1977, %v1976
          %v2093 = vpack.c.bf16 %v1979, %v1978
          %v2094 = vpack.c.bf16 %v1981, %v1980
          %v2095 = vpack.c.bf16 %v1983, %v1982
          %v2096 = vpack.c.bf16 %v1985, %v1984
          %v2097 = vpack.c.bf16 %v1987, %v1986
          %v2098 = vpack.c.bf16 %v1989, %v1988
          %v2099 = vpack.c.bf16 %v1991, %v1990
          %v2100 = vpack.c.bf16 %v1993, %v1992
          %v2101 = vpack.c.bf16 %v1995, %v1994
          %v2102 = vpack.c.bf16 %v1997, %v1996
          %v2103 = vpack.c.bf16 %v1999, %v1998
          %v2104 = vpack.c.bf16 %v2001, %v2000
          %v2105 = vpack.c.bf16 %v2003, %v2002
          %v2106 = vpack.c.bf16 %v2005, %v2004
          %v2107 = vpack.c.bf16 %v2007, %v2006
          %v2108 = vpack.c.bf16 %v2009, %v2008
          %v2109 = vpack.c.bf16 %v2011, %v2010
          %v2110 = vpack.c.bf16 %v2013, %v2012
          %v2111 = vpack.c.bf16 %v2015, %v2014
          %v2112 = vpack.c.bf16 %v2017, %v2016
          %v2113 = vpack.c.bf16 %v2019, %v2018
          %v2114 = vpack.c.bf16 %v2021, %v2020
          %v2115 = vpack.c.bf16 %v2023, %v2022
          %v2116 = vpack.c.bf16 %v2025, %v2024
          %v2117 = vpack.c.bf16 %v2027, %v2026
          %v2118 = vpack.c.bf16 %v2029, %v2028
          %v2119 = vpack.c.bf16 %v2031, %v2030
          %v2120 = vpack.c.bf16 %v2033, %v2032
          %v2121 = vpack.c.bf16 %v2035, %v2034
          %v2122 = vpack.c.bf16 %v2037, %v2036
          %v2123 = vpack.c.bf16 %v2039, %v2038
          %v2124 = vpack.c.bf16 %v2041, %v2040
          %v2125 = vpack.c.bf16 %v2043, %v2042
          %v2126 = vpack.c.bf16 %v2045, %v2044
          %v2127 = vpack.c.bf16 %v2047, %v2046
          %v2128 = vpack.c.bf16 %v2049, %v2048
          %v2129 = vpack.c.bf16 %v2051, %v2050
          %v2130 = vpack.c.bf16 %v2053, %v2052
          %v2131 = vpack.c.bf16 %v2055, %v2054
          %v2132 = vpack.c.bf16 %v2057, %v2056
          %v2133 = vpack.c.bf16 %v2059, %v2058
          %v2134 = vpack.c.bf16 %v2061, %v2060
          %v2135 = vpack.c.bf16 %v2063, %v2062
          %v2136 = vpack.c.bf16 %v2065, %v2064
          %v2137 = vpack.c.bf16 %v2067, %v2066
          %v2138 = vpack.c.bf16 %v2069, %v2068
          %v2139 = vpack.c.bf16 %v2071, %v2070
          %v2140 = vpack.c.bf16 %v2073, %v2072
          %v2141 = vpack.c.bf16 %v2075, %v2074
          %v2142 = vpack.c.bf16 %v2077, %v2076
          %v2143 = vpack.c.bf16 %v2079, %v2078
          %v2208 = vunpack.c.l.b16 %v2080
          %v2209 = vunpack.c.h.b16 %v2080
          %v2210 = vunpack.c.l.b16 %v2081
          %v2211 = vunpack.c.h.b16 %v2081
          %v2212 = vunpack.c.l.b16 %v2082
          %v2213 = vunpack.c.h.b16 %v2082
          %v2214 = vunpack.c.l.b16 %v2083
          %v2215 = vunpack.c.h.b16 %v2083
          %v2216 = vunpack.c.l.b16 %v2084
          %v2217 = vunpack.c.h.b16 %v2084
          %v2218 = vunpack.c.l.b16 %v2085
          %v2219 = vunpack.c.h.b16 %v2085
          %v2220 = vunpack.c.l.b16 %v2086
          %v2221 = vunpack.c.h.b16 %v2086
          %v2222 = vunpack.c.l.b16 %v2087
          %v2223 = vunpack.c.h.b16 %v2087
          %v2224 = vunpack.c.l.b16 %v2088
          %v2225 = vunpack.c.h.b16 %v2088
          %v2226 = vunpack.c.l.b16 %v2089
          %v2227 = vunpack.c.h.b16 %v2089
          %v2228 = vunpack.c.l.b16 %v2090
          %v2229 = vunpack.c.h.b16 %v2090
          %v2230 = vunpack.c.l.b16 %v2091
          %v2231 = vunpack.c.h.b16 %v2091
          %v2232 = vunpack.c.l.b16 %v2092
          %v2233 = vunpack.c.h.b16 %v2092
          %v2234 = vunpack.c.l.b16 %v2093
          %v2235 = vunpack.c.h.b16 %v2093
          %v2236 = vunpack.c.l.b16 %v2094
          %v2237 = vunpack.c.h.b16 %v2094
          %v2238 = vunpack.c.l.b16 %v2095
          %v2239 = vunpack.c.h.b16 %v2095
          %v2240 = vunpack.c.l.b16 %v2096
          %v2241 = vunpack.c.h.b16 %v2096
          %v2242 = vunpack.c.l.b16 %v2097
          %v2243 = vunpack.c.h.b16 %v2097
          %v2244 = vunpack.c.l.b16 %v2098
          %v2245 = vunpack.c.h.b16 %v2098
          %v2246 = vunpack.c.l.b16 %v2099
          %v2247 = vunpack.c.h.b16 %v2099
          %v2248 = vunpack.c.l.b16 %v2100
          %v2249 = vunpack.c.h.b16 %v2100
          %v2250 = vunpack.c.l.b16 %v2101
          %v2251 = vunpack.c.h.b16 %v2101
          %v2252 = vunpack.c.l.b16 %v2102
          %v2253 = vunpack.c.h.b16 %v2102
          %v2254 = vunpack.c.l.b16 %v2103
          %v2255 = vunpack.c.h.b16 %v2103
          %v2256 = vunpack.c.l.b16 %v2104
          %v2257 = vunpack.c.h.b16 %v2104
          %v2258 = vunpack.c.l.b16 %v2105
          %v2259 = vunpack.c.h.b16 %v2105
          %v2260 = vunpack.c.l.b16 %v2106
          %v2261 = vunpack.c.h.b16 %v2106
          %v2262 = vunpack.c.l.b16 %v2107
          %v2263 = vunpack.c.h.b16 %v2107
          %v2264 = vunpack.c.l.b16 %v2108
          %v2265 = vunpack.c.h.b16 %v2108
          %v2266 = vunpack.c.l.b16 %v2109
          %v2267 = vunpack.c.h.b16 %v2109
          %v2268 = vunpack.c.l.b16 %v2110
          %v2269 = vunpack.c.h.b16 %v2110
          %v2270 = vunpack.c.l.b16 %v2111
          %v2271 = vunpack.c.h.b16 %v2111
          %v2272 = vunpack.c.l.b16 %v2112
          %v2273 = vunpack.c.h.b16 %v2112
          %v2274 = vunpack.c.l.b16 %v2113
          %v2275 = vunpack.c.h.b16 %v2113
          %v2276 = vunpack.c.l.b16 %v2114
          %v2277 = vunpack.c.h.b16 %v2114
          %v2278 = vunpack.c.l.b16 %v2115
          %v2279 = vunpack.c.h.b16 %v2115
          %v2280 = vunpack.c.l.b16 %v2116
          %v2281 = vunpack.c.h.b16 %v2116
          %v2282 = vunpack.c.l.b16 %v2117
          %v2283 = vunpack.c.h.b16 %v2117
          %v2284 = vunpack.c.l.b16 %v2118
          %v2285 = vunpack.c.h.b16 %v2118
          %v2286 = vunpack.c.l.b16 %v2119
          %v2287 = vunpack.c.h.b16 %v2119
          %v2288 = vunpack.c.l.b16 %v2120
          %v2289 = vunpack.c.h.b16 %v2120
          %v2290 = vunpack.c.l.b16 %v2121
          %v2291 = vunpack.c.h.b16 %v2121
          %v2292 = vunpack.c.l.b16 %v2122
          %v2293 = vunpack.c.h.b16 %v2122
          %v2294 = vunpack.c.l.b16 %v2123
          %v2295 = vunpack.c.h.b16 %v2123
          %v2296 = vunpack.c.l.b16 %v2124
          %v2297 = vunpack.c.h.b16 %v2124
          %v2298 = vunpack.c.l.b16 %v2125
          %v2299 = vunpack.c.h.b16 %v2125
          %v2300 = vunpack.c.l.b16 %v2126
          %v2301 = vunpack.c.h.b16 %v2126
          %v2302 = vunpack.c.l.b16 %v2127
          %v2303 = vunpack.c.h.b16 %v2127
          %v2304 = vunpack.c.l.b16 %v2128
          %v2305 = vunpack.c.h.b16 %v2128
          %v2306 = vunpack.c.l.b16 %v2129
          %v2307 = vunpack.c.h.b16 %v2129
          %v2308 = vunpack.c.l.b16 %v2130
          %v2309 = vunpack.c.h.b16 %v2130
          %v2310 = vunpack.c.l.b16 %v2131
          %v2311 = vunpack.c.h.b16 %v2131
          %v2312 = vunpack.c.l.b16 %v2132
          %v2313 = vunpack.c.h.b16 %v2132
          %v2314 = vunpack.c.l.b16 %v2133
          %v2315 = vunpack.c.h.b16 %v2133
          %v2316 = vunpack.c.l.b16 %v2134
          %v2317 = vunpack.c.h.b16 %v2134
          %v2318 = vunpack.c.l.b16 %v2135
          %v2319 = vunpack.c.h.b16 %v2135
          %v2320 = vunpack.c.l.b16 %v2136
          %v2321 = vunpack.c.h.b16 %v2136
          %v2322 = vunpack.c.l.b16 %v2137
          %v2323 = vunpack.c.h.b16 %v2137
          %v2324 = vunpack.c.l.b16 %v2138
          %v2325 = vunpack.c.h.b16 %v2138
          %v2326 = vunpack.c.l.b16 %v2139
          %v2327 = vunpack.c.h.b16 %v2139
          %v2328 = vunpack.c.l.b16 %v2140
          %v2329 = vunpack.c.h.b16 %v2140
          %v2330 = vunpack.c.l.b16 %v2141
          %v2331 = vunpack.c.h.b16 %v2141
          %v2332 = vunpack.c.l.b16 %v2142
          %v2333 = vunpack.c.h.b16 %v2142
          %v2334 = vunpack.c.l.b16 %v2143
          %v2335 = vunpack.c.h.b16 %v2143
          %v2336 = vpack.c.b16 %v2208, %v2208
          %v2337 = vpack.c.b16 %v2209, %v2209
          %v2338 = vpack.c.b16 %v2210, %v2210
          %v2339 = vpack.c.b16 %v2211, %v2211
          %v2340 = vpack.c.b16 %v2212, %v2212
          %v2341 = vpack.c.b16 %v2213, %v2213
          %v2342 = vpack.c.b16 %v2214, %v2214
          %v2343 = vpack.c.b16 %v2215, %v2215
          %v2344 = vpack.c.b16 %v2216, %v2216
          %v2345 = vpack.c.b16 %v2217, %v2217
          %v2346 = vpack.c.b16 %v2218, %v2218
          %v2347 = vpack.c.b16 %v2219, %v2219
          %v2348 = vpack.c.b16 %v2220, %v2220
          %v2349 = vpack.c.b16 %v2221, %v2221
          %v2350 = vpack.c.b16 %v2222, %v2222
          %v2351 = vpack.c.b16 %v2223, %v2223
          %v2352 = vpack.c.b16 %v2224, %v2224
          %v2353 = vpack.c.b16 %v2225, %v2225
          %v2354 = vpack.c.b16 %v2226, %v2226
          %v2355 = vpack.c.b16 %v2227, %v2227
          %v2356 = vpack.c.b16 %v2228, %v2228
          %v2357 = vpack.c.b16 %v2229, %v2229
          %v2358 = vpack.c.b16 %v2230, %v2230
          %v2359 = vpack.c.b16 %v2231, %v2231
          %v2360 = vpack.c.b16 %v2232, %v2232
          %v2361 = vpack.c.b16 %v2233, %v2233
          %v2362 = vpack.c.b16 %v2234, %v2234
          %v2363 = vpack.c.b16 %v2235, %v2235
          %v2364 = vpack.c.b16 %v2236, %v2236
          %v2365 = vpack.c.b16 %v2237, %v2237
          %v2366 = vpack.c.b16 %v2238, %v2238
          %v2367 = vpack.c.b16 %v2239, %v2239
          %v2368 = vpack.c.b16 %v2240, %v2240
          %v2369 = vpack.c.b16 %v2241, %v2241
          %v2370 = vpack.c.b16 %v2242, %v2242
          %v2371 = vpack.c.b16 %v2243, %v2243
          %v2372 = vpack.c.b16 %v2244, %v2244
          %v2373 = vpack.c.b16 %v2245, %v2245
          %v2374 = vpack.c.b16 %v2246, %v2246
          %v2375 = vpack.c.b16 %v2247, %v2247
          %v2376 = vpack.c.b16 %v2248, %v2248
          %v2377 = vpack.c.b16 %v2249, %v2249
          %v2378 = vpack.c.b16 %v2250, %v2250
          %v2379 = vpack.c.b16 %v2251, %v2251
          %v2380 = vpack.c.b16 %v2252, %v2252
          %v2381 = vpack.c.b16 %v2253, %v2253
          %v2382 = vpack.c.b16 %v2254, %v2254
          %v2383 = vpack.c.b16 %v2255, %v2255
          %v2384 = vpack.c.b16 %v2256, %v2256
          %v2385 = vpack.c.b16 %v2257, %v2257
          %v2386 = vpack.c.b16 %v2258, %v2258
          %v2387 = vpack.c.b16 %v2259, %v2259
          %v2388 = vpack.c.b16 %v2260, %v2260
          %v2389 = vpack.c.b16 %v2261, %v2261
          %v2390 = vpack.c.b16 %v2262, %v2262
          %v2391 = vpack.c.b16 %v2263, %v2263
          %v2392 = vpack.c.b16 %v2264, %v2264
          %v2393 = vpack.c.b16 %v2265, %v2265
          %v2394 = vpack.c.b16 %v2266, %v2266
          %v2395 = vpack.c.b16 %v2267, %v2267
          %v2396 = vpack.c.b16 %v2268, %v2268
          %v2397 = vpack.c.b16 %v2269, %v2269
          %v2398 = vpack.c.b16 %v2270, %v2270
          %v2399 = vpack.c.b16 %v2271, %v2271
          %v2400 = vpack.c.b16 %v2272, %v2272
          %v2401 = vpack.c.b16 %v2273, %v2273
          %v2402 = vpack.c.b16 %v2274, %v2274
          %v2403 = vpack.c.b16 %v2275, %v2275
          %v2404 = vpack.c.b16 %v2276, %v2276
          %v2405 = vpack.c.b16 %v2277, %v2277
          %v2406 = vpack.c.b16 %v2278, %v2278
          %v2407 = vpack.c.b16 %v2279, %v2279
          %v2408 = vpack.c.b16 %v2280, %v2280
          %v2409 = vpack.c.b16 %v2281, %v2281
          %v2410 = vpack.c.b16 %v2282, %v2282
          %v2411 = vpack.c.b16 %v2283, %v2283
          %v2412 = vpack.c.b16 %v2284, %v2284
          %v2413 = vpack.c.b16 %v2285, %v2285
          %v2414 = vpack.c.b16 %v2286, %v2286
          %v2415 = vpack.c.b16 %v2287, %v2287
          %v2416 = vpack.c.b16 %v2288, %v2288
          %v2417 = vpack.c.b16 %v2289, %v2289
          %v2418 = vpack.c.b16 %v2290, %v2290
          %v2419 = vpack.c.b16 %v2291, %v2291
          %v2420 = vpack.c.b16 %v2292, %v2292
          %v2421 = vpack.c.b16 %v2293, %v2293
          %v2422 = vpack.c.b16 %v2294, %v2294
          %v2423 = vpack.c.b16 %v2295, %v2295
          %v2424 = vpack.c.b16 %v2296, %v2296
          %v2425 = vpack.c.b16 %v2297, %v2297
          %v2426 = vpack.c.b16 %v2298, %v2298
          %v2427 = vpack.c.b16 %v2299, %v2299
          %v2428 = vpack.c.b16 %v2300, %v2300
          %v2429 = vpack.c.b16 %v2301, %v2301
          %v2430 = vpack.c.b16 %v2302, %v2302
          %v2431 = vpack.c.b16 %v2303, %v2303
          %v2432 = vpack.c.b16 %v2304, %v2304
          %v2433 = vpack.c.b16 %v2305, %v2305
          %v2434 = vpack.c.b16 %v2306, %v2306
          %v2435 = vpack.c.b16 %v2307, %v2307
          %v2436 = vpack.c.b16 %v2308, %v2308
          %v2437 = vpack.c.b16 %v2309, %v2309
          %v2438 = vpack.c.b16 %v2310, %v2310
          %v2439 = vpack.c.b16 %v2311, %v2311
          %v2440 = vpack.c.b16 %v2312, %v2312
          %v2441 = vpack.c.b16 %v2313, %v2313
          %v2442 = vpack.c.b16 %v2314, %v2314
          %v2443 = vpack.c.b16 %v2315, %v2315
          %v2444 = vpack.c.b16 %v2316, %v2316
          %v2445 = vpack.c.b16 %v2317, %v2317
          %v2446 = vpack.c.b16 %v2318, %v2318
          %v2447 = vpack.c.b16 %v2319, %v2319
          %v2448 = vpack.c.b16 %v2320, %v2320
          %v2449 = vpack.c.b16 %v2321, %v2321
          %v2450 = vpack.c.b16 %v2322, %v2322
          %v2451 = vpack.c.b16 %v2323, %v2323
          %v2452 = vpack.c.b16 %v2324, %v2324
          %v2453 = vpack.c.b16 %v2325, %v2325
          %v2454 = vpack.c.b16 %v2326, %v2326
          %v2455 = vpack.c.b16 %v2327, %v2327
          %v2456 = vpack.c.b16 %v2328, %v2328
          %v2457 = vpack.c.b16 %v2329, %v2329
          %v2458 = vpack.c.b16 %v2330, %v2330
          %v2459 = vpack.c.b16 %v2331, %v2331
          %v2460 = vpack.c.b16 %v2332, %v2332
          %v2461 = vpack.c.b16 %v2333, %v2333
          %v2462 = vpack.c.b16 %v2334, %v2334
          %v2463 = vpack.c.b16 %v2335, %v2335
          %2592 = vst [vmem:[%s200] sm:$0xf] %v2336
          %2593 = vst [vmem:[%s200 + $0x4] sm:$0xf] %v2337
          %2594 = vst [vmem:[%s200 + $0x8] sm:$0xf] %v2338
          %2595 = vst [vmem:[%s200 + $0xc] sm:$0xf] %v2339
          %2596 = vst [vmem:[%s200 + $0x10] sm:$0xf] %v2340
          %2597 = vst [vmem:[%s200 + $0x14] sm:$0xf] %v2341
          %2598 = vst [vmem:[%s200 + $0x18] sm:$0xf] %v2342
          %2599 = vst [vmem:[%s200 + $0x1c] sm:$0xf] %v2343
          %2600 = vst [vmem:[%s200 + $0x20] sm:$0xf] %v2344
          %2601 = vst [vmem:[%s200 + $0x24] sm:$0xf] %v2345
          %2602 = vst [vmem:[%s200 + $0x28] sm:$0xf] %v2346
          %2603 = vst [vmem:[%s200 + $0x2c] sm:$0xf] %v2347
          %2604 = vst [vmem:[%s200 + $0x30] sm:$0xf] %v2348
          %2605 = vst [vmem:[%s200 + $0x34] sm:$0xf] %v2349
          %2606 = vst [vmem:[%s200 + $0x38] sm:$0xf] %v2350
          %2607 = vst [vmem:[%s200 + $0x3c] sm:$0xf] %v2351
          %2608 = vst [vmem:[%s200 + $0x40] sm:$0xf] %v2352
          %2609 = vst [vmem:[%s200 + $0x44] sm:$0xf] %v2353
          %2610 = vst [vmem:[%s200 + $0x48] sm:$0xf] %v2354
          %2611 = vst [vmem:[%s200 + $0x4c] sm:$0xf] %v2355
          %2612 = vst [vmem:[%s200 + $0x50] sm:$0xf] %v2356
          %2613 = vst [vmem:[%s200 + $0x54] sm:$0xf] %v2357
          %2614 = vst [vmem:[%s200 + $0x58] sm:$0xf] %v2358
          %2615 = vst [vmem:[%s200 + $0x5c] sm:$0xf] %v2359
          %2616 = vst [vmem:[%s200 + $0x60] sm:$0xf] %v2360
          %2617 = vst [vmem:[%s200 + $0x64] sm:$0xf] %v2361
          %2618 = vst [vmem:[%s200 + $0x68] sm:$0xf] %v2362
          %2619 = vst [vmem:[%s200 + $0x6c] sm:$0xf] %v2363
          %2620 = vst [vmem:[%s200 + $0x70] sm:$0xf] %v2364
          %2621 = vst [vmem:[%s200 + $0x74] sm:$0xf] %v2365
          %2622 = vst [vmem:[%s200 + $0x78] sm:$0xf] %v2366
          %2623 = vst [vmem:[%s200 + $0x7c] sm:$0xf] %v2367
          %2624 = vst [vmem:[%s200 + $0x80] sm:$0xf] %v2368
          %2625 = vst [vmem:[%s200 + $0x84] sm:$0xf] %v2369
          %2626 = vst [vmem:[%s200 + $0x88] sm:$0xf] %v2370
          %2627 = vst [vmem:[%s200 + $0x8c] sm:$0xf] %v2371
          %2628 = vst [vmem:[%s200 + $0x90] sm:$0xf] %v2372
          %2629 = vst [vmem:[%s200 + $0x94] sm:$0xf] %v2373
          %2630 = vst [vmem:[%s200 + $0x98] sm:$0xf] %v2374
          %2631 = vst [vmem:[%s200 + $0x9c] sm:$0xf] %v2375
          %2632 = vst [vmem:[%s200 + $0xa0] sm:$0xf] %v2376
          %2633 = vst [vmem:[%s200 + $0xa4] sm:$0xf] %v2377
          %2634 = vst [vmem:[%s200 + $0xa8] sm:$0xf] %v2378
          %2635 = vst [vmem:[%s200 + $0xac] sm:$0xf] %v2379
          %2636 = vst [vmem:[%s200 + $0xb0] sm:$0xf] %v2380
          %2637 = vst [vmem:[%s200 + $0xb4] sm:$0xf] %v2381
          %2638 = vst [vmem:[%s200 + $0xb8] sm:$0xf] %v2382
          %2639 = vst [vmem:[%s200 + $0xbc] sm:$0xf] %v2383
          %2640 = vst [vmem:[%s200 + $0xc0] sm:$0xf] %v2384
          %2641 = vst [vmem:[%s200 + $0xc4] sm:$0xf] %v2385
          %2642 = vst [vmem:[%s200 + $0xc8] sm:$0xf] %v2386
          %2643 = vst [vmem:[%s200 + $0xcc] sm:$0xf] %v2387
          %2644 = vst [vmem:[%s200 + $0xd0] sm:$0xf] %v2388
          %2645 = vst [vmem:[%s200 + $0xd4] sm:$0xf] %v2389
          %2646 = vst [vmem:[%s200 + $0xd8] sm:$0xf] %v2390
          %2647 = vst [vmem:[%s200 + $0xdc] sm:$0xf] %v2391
          %2648 = vst [vmem:[%s200 + $0xe0] sm:$0xf] %v2392
          %2649 = vst [vmem:[%s200 + $0xe4] sm:$0xf] %v2393
          %2650 = vst [vmem:[%s200 + $0xe8] sm:$0xf] %v2394
          %2651 = vst [vmem:[%s200 + $0xec] sm:$0xf] %v2395
          %2652 = vst [vmem:[%s200 + $0xf0] sm:$0xf] %v2396
          %2653 = vst [vmem:[%s200 + $0xf4] sm:$0xf] %v2397
          %2654 = vst [vmem:[%s200 + $0xf8] sm:$0xf] %v2398
          %2655 = vst [vmem:[%s200 + $0xfc] sm:$0xf] %v2399
          %2656 = vst [vmem:[%s200 + $0x100] sm:$0xf] %v2400
          %2657 = vst [vmem:[%s200 + $0x104] sm:$0xf] %v2401
          %2658 = vst [vmem:[%s200 + $0x108] sm:$0xf] %v2402
          %2659 = vst [vmem:[%s200 + $0x10c] sm:$0xf] %v2403
          %2660 = vst [vmem:[%s200 + $0x110] sm:$0xf] %v2404
          %2661 = vst [vmem:[%s200 + $0x114] sm:$0xf] %v2405
          %2662 = vst [vmem:[%s200 + $0x118] sm:$0xf] %v2406
          %2663 = vst [vmem:[%s200 + $0x11c] sm:$0xf] %v2407
          %2664 = vst [vmem:[%s200 + $0x120] sm:$0xf] %v2408
          %2665 = vst [vmem:[%s200 + $0x124] sm:$0xf] %v2409
          %2666 = vst [vmem:[%s200 + $0x128] sm:$0xf] %v2410
          %2667 = vst [vmem:[%s200 + $0x12c] sm:$0xf] %v2411
          %2668 = vst [vmem:[%s200 + $0x130] sm:$0xf] %v2412
          %2669 = vst [vmem:[%s200 + $0x134] sm:$0xf] %v2413
          %2670 = vst [vmem:[%s200 + $0x138] sm:$0xf] %v2414
          %2671 = vst [vmem:[%s200 + $0x13c] sm:$0xf] %v2415
          %2672 = vst [vmem:[%s200 + $0x140] sm:$0xf] %v2416
          %2673 = vst [vmem:[%s200 + $0x144] sm:$0xf] %v2417
          %2674 = vst [vmem:[%s200 + $0x148] sm:$0xf] %v2418
          %2675 = vst [vmem:[%s200 + $0x14c] sm:$0xf] %v2419
          %2676 = vst [vmem:[%s200 + $0x150] sm:$0xf] %v2420
          %2677 = vst [vmem:[%s200 + $0x154] sm:$0xf] %v2421
          %2678 = vst [vmem:[%s200 + $0x158] sm:$0xf] %v2422
          %2679 = vst [vmem:[%s200 + $0x15c] sm:$0xf] %v2423
          %2680 = vst [vmem:[%s200 + $0x160] sm:$0xf] %v2424
          %2681 = vst [vmem:[%s200 + $0x164] sm:$0xf] %v2425
          %2682 = vst [vmem:[%s200 + $0x168] sm:$0xf] %v2426
          %2683 = vst [vmem:[%s200 + $0x16c] sm:$0xf] %v2427
          %2684 = vst [vmem:[%s200 + $0x170] sm:$0xf] %v2428
          %2685 = vst [vmem:[%s200 + $0x174] sm:$0xf] %v2429
          %2686 = vst [vmem:[%s200 + $0x178] sm:$0xf] %v2430
          %2687 = vst [vmem:[%s200 + $0x17c] sm:$0xf] %v2431
          %2688 = vst [vmem:[%s200 + $0x180] sm:$0xf] %v2432
          %2689 = vst [vmem:[%s200 + $0x184] sm:$0xf] %v2433
          %2690 = vst [vmem:[%s200 + $0x188] sm:$0xf] %v2434
          %2691 = vst [vmem:[%s200 + $0x18c] sm:$0xf] %v2435
          %2692 = vst [vmem:[%s200 + $0x190] sm:$0xf] %v2436
          %2693 = vst [vmem:[%s200 + $0x194] sm:$0xf] %v2437
          %2694 = vst [vmem:[%s200 + $0x198] sm:$0xf] %v2438
          %2695 = vst [vmem:[%s200 + $0x19c] sm:$0xf] %v2439
          %2696 = vst [vmem:[%s200 + $0x1a0] sm:$0xf] %v2440
          %2697 = vst [vmem:[%s200 + $0x1a4] sm:$0xf] %v2441
          %2698 = vst [vmem:[%s200 + $0x1a8] sm:$0xf] %v2442
          %2699 = vst [vmem:[%s200 + $0x1ac] sm:$0xf] %v2443
          %2700 = vst [vmem:[%s200 + $0x1b0] sm:$0xf] %v2444
          %2701 = vst [vmem:[%s200 + $0x1b4] sm:$0xf] %v2445
          %2702 = vst [vmem:[%s200 + $0x1b8] sm:$0xf] %v2446
          %2703 = vst [vmem:[%s200 + $0x1bc] sm:$0xf] %v2447
          %2704 = vst [vmem:[%s200 + $0x1c0] sm:$0xf] %v2448
          %2705 = vst [vmem:[%s200 + $0x1c4] sm:$0xf] %v2449
          %2706 = vst [vmem:[%s200 + $0x1c8] sm:$0xf] %v2450
          %2707 = vst [vmem:[%s200 + $0x1cc] sm:$0xf] %v2451
          %2708 = vst [vmem:[%s200 + $0x1d0] sm:$0xf] %v2452
          %2709 = vst [vmem:[%s200 + $0x1d4] sm:$0xf] %v2453
          %2710 = vst [vmem:[%s200 + $0x1d8] sm:$0xf] %v2454
          %2711 = vst [vmem:[%s200 + $0x1dc] sm:$0xf] %v2455
          %2712 = vst [vmem:[%s200 + $0x1e0] sm:$0xf] %v2456
          %2713 = vst [vmem:[%s200 + $0x1e4] sm:$0xf] %v2457
          %2714 = vst [vmem:[%s200 + $0x1e8] sm:$0xf] %v2458
          %2715 = vst [vmem:[%s200 + $0x1ec] sm:$0xf] %v2459
          %2716 = vst [vmem:[%s200 + $0x1f0] sm:$0xf] %v2460
          %2717 = vst [vmem:[%s200 + $0x1f4] sm:$0xf] %v2461
          %2718 = vst [vmem:[%s200 + $0x1f8] sm:$0xf] %v2462
          %2719 = vst [vmem:[%s200 + $0x1fc] sm:$0xf] %v2463
        $region40: #{tpu_custom_call.1} parent=31 // pred_fallthru
          _
        %s2720 = sand.u32 %s112, 1
        %s2721 = scalar_lea.sflag [#allocation4], %s2720
        %s2722 = sand.u32 %s112, 1
        %s2723 = smul.addr %s2722, 512
        %s2724 = scalar_lea.vmem [#allocation3], %s2723
        // Predicated region
        $region41: #{tpu_custom_call.1} parent=31 // pred_check
          %p2725 = pneg %p122
        $region42: #{tpu_custom_call.1} parent=31 // pred_check_branch
          %2727 = sbr.rel (%p2725) target = $region44
        $region43: #{tpu_custom_call.1} parent=31 // pred_region
          %s2728 = smul.u32 128, %s21
          %s2730 = ssub.s32 8192, 8192
          %2731 = vsyncadd %s2721, %s2730
          %s2732 = smul.addr %s2728, 64
          %s2733 = scalar_lea.hbm %s3, %s2732
          %s2734 = sshll.u32 %s2724, 4
          %s2735 = int_to_ptr.vmem [resolvable:$true] %s2734
          %2740 = dma.vmem_to_hbm [thread:$0]  %s2735, 8192, %s2733, %s2721, 64, 64, 4
        $region44: #{tpu_custom_call.1} parent=31 // pred_fallthru
          _
      $region32: #{tpu_custom_call.1} parent=5 // pred_fallthru
        _
      %p2741 = scmp.le.s32.totalorder 2, %s12
      // Predicated region
      $region45: #{tpu_custom_call.1} parent=5 // pred_check
        %p2742 = pneg %p2741
      $region46: #{tpu_custom_call.1} parent=5 // pred_check_branch
        %2744 = sbr.rel (%p2742) target = $region48
      $region47: #{tpu_custom_call.1} parent=5 // pred_region
        %s2745 = ssub.s32 %s12, 2
        // Predicated region
        $region49: #{tpu_custom_call.1} parent=47 // pred_check
          %p2746 = pneg %p128
        $region50: #{tpu_custom_call.1} parent=47 // pred_check_branch
          %2748 = sbr.rel (%p2746) target = $region52
        $region51: #{tpu_custom_call.1} parent=47 // pred_region
          %s2749 = sand.u32 %s113, 1
          %s2750 = scalar_lea.sflag [#allocation4], %s2749
          %s2751 = sand.u32 %s113, 1
          %s2752 = smul.addr %s2751, 512
          %s2753 = scalar_lea.vmem [#allocation3], %s2752
          %2754 = dma.done %s2750, 8192
        $region52: #{tpu_custom_call.1} parent=47 // pred_fallthru
          _
      $region48: #{tpu_custom_call.1} parent=5 // pred_fallthru
        _
    $region6: #{tpu_custom_call.1} parent=1 // loop_footer
      %s16 = sadd.s32 1, %s12
    $region7: #{tpu_custom_call.1} parent=1 // loop_footer_branch
      %11 = sbr.rel target = $region3
    $region8: #{tpu_custom_call.1} parent=1 // loop_exit
      _
    %2755 = vsyncpa [#allocation4], 1
    %s2756 = scalar_lea.sflag [#allocation4], 1
    %2757 = vsyncpa %s2756, 1

</llo_original>
